<compile_context>
chip_gen: v7x
topology: tpu7x:2x2x1
jax: 0.10.0
libtpu: 0.0.40
codegen_flags: <defaults>
</compile_context>

<pallas_src>
import jax
import jax.numpy as jnp
from jax.experimental import pallas as pl
from jax.experimental.pallas import tpu as pltpu

EPS = 1e-5  # layer_norm_eps in the PyTorch module


# --------------------------- fused Pallas kernel -----------------------------

def _make_fused_kernel(num_head, head_dim, hidden, compute_dtype):
    """Mapper + pos_embed + post-norm encoder layer (per grid step) + final LN.

    Grid = (batch, layer).  The layer axis is "arbitrary"; the (S, H)
    activation lives in a VMEM scratch across layer steps.
    """
    approx_recip = compute_dtype != jnp.float32
    nt_dims = (((1,), (1,)), ((), ()))  # contract last dims of both operands
    H = hidden

    def kernel(src_ref, mask_ref,
               mw_ref, posb_ref,
               wqkv_ref, bqkv_ref, wo_ref, bo_ref,
               g1_ref, be1_ref, w1_ref, bf1_ref, w2_ref, bf2_ref, g2_ref, be2_ref,
               ng_ref, nb_ref,
               o_ref, x_sc):
        l = pl.program_id(1)
        last_l = pl.num_programs(1) - 1

        def layer_norm(y, g, b):
            mu = jnp.mean(y, axis=-1, keepdims=True)
            var = jnp.mean((y - mu) ** 2, axis=-1, keepdims=True)
            return (y - mu) * jax.lax.rsqrt(var + EPS) * g + b

        # ---- mapper + pos_embed: only on the first layer step of each batch --
        @pl.when(l == 0)
        def _():
            xin = src_ref[0].astype(compute_dtype)
            y = jnp.dot(xin, mw_ref[...], preferred_element_type=jnp.float32)
            x_sc[...] = y + posb_ref[0]        # mapper bias folded into posb

        x = x_sc[...]                          # (S, H) f32, resident across layers
        xc = x.astype(compute_dtype)
        add_mask = mask_ref[0]                 # (1, S) additive key-padding mask

        # ---- fused QKV projection (scale folded into the Q slice) -----------
        qkv = jnp.dot(xc, wqkv_ref[0],
                      preferred_element_type=jnp.float32) + bqkv_ref[0]   # (S, 3H)

        heads = []
        for h in range(num_head):              # static unroll over heads
            lo = h * head_dim
            qh = qkv[:, lo:lo + head_dim].astype(compute_dtype)
            kh = qkv[:, H + lo:H + lo + head_dim].astype(compute_dtype)
            vh = qkv[:, 2 * H + lo:2 * H + lo + head_dim].astype(compute_dtype)
            # (S, S) scores via dot_general (no explicit transpose of kh)
            s = jax.lax.dot_general(qh, kh, nt_dims,
                                    preferred_element_type=jnp.float32)
            s = s + add_mask
            s = s - jnp.max(s, axis=-1, keepdims=True)
            p = jnp.exp(s)
            p = p * pl.reciprocal(jnp.sum(p, axis=-1, keepdims=True),
                                  approx=approx_recip)
            heads.append(jnp.dot(p.astype(compute_dtype), vh,
                                 preferred_element_type=jnp.float32))
        # single output-projection GEMM with contraction dim = H
        concat = jnp.concatenate(heads, axis=-1).astype(compute_dtype)    # (S, H)
        attn = jnp.dot(concat, wo_ref[0],
                       preferred_element_type=jnp.float32) + bo_ref[0]

        # ---- post-norm residual blocks (PyTorch norm_first=False default) ----
        y = layer_norm(x + attn, g1_ref[0], be1_ref[0])
        h1 = jnp.maximum(
            jnp.dot(y.astype(compute_dtype), w1_ref[0],
                    preferred_element_type=jnp.float32) + bf1_ref[0], 0.0)
        h2 = jnp.dot(h1.astype(compute_dtype), w2_ref[0],
                     preferred_element_type=jnp.float32) + bf2_ref[0]
        z = layer_norm(y + h2, g2_ref[0], be2_ref[0])
        x_sc[...] = z

        # ---- final encoder LayerNorm, write output once per batch element ----
        @pl.when(l == last_l)
        def _():
            o_ref[0] = layer_norm(z, ng_ref[...], nb_ref[...]).astype(o_ref.dtype)

    return kernel


# --------------------------- pallas_call wrapper ------------------------------

def _invariant_spec(arr):
    n = arr.ndim
    return pl.BlockSpec(arr.shape, lambda b, l, n=n: (0,) * n)


def _layer_spec(arr):
    n = arr.ndim
    return pl.BlockSpec((1,) + arr.shape[1:],
                        lambda b, l, n=n: (l,) + (0,) * (n - 1))


def _prepare_params(params, S, num_head, compute_dtype):
    """Stack per-layer weights along a leading layer axis; fuse QKV; fold scale."""
    H = params["mapper_w"].shape[1]
    assert H % num_head == 0
    head_dim = H // num_head
    scale = 1.0 / (head_dim ** 0.5)
    layers = params["layers"]

    def stk(name):
        return jnp.stack([lp[name] for lp in layers])

    def mat(x):   # matmul operands: optionally bf16 (halves DMA / VMEM bytes)
        return x.astype(compute_dtype)

    def vec(x):   # (L, D) -> (L, 1, D); biases / LN params stay f32
        return x.reshape(x.shape[0], 1, x.shape[1]).astype(jnp.float32)

    # Fused QKV weights/bias; attention scale folded into the Q slice.
    wqkv = jnp.concatenate([stk("wq") * scale, stk("wk"), stk("wv")], axis=-1)
    bqkv = jnp.concatenate([stk("bq") * scale, stk("bk"), stk("bv")], axis=-1)

    # mapper bias folded into the (sliced) positional embedding.
    pos_b = (params["pos_embed"][:, :S, :]
             + params["mapper_b"][None, None, :]).astype(jnp.float32)

    return {
        "mapper_w": mat(params["mapper_w"]),
        "pos_b": pos_b,
        "wqkv": mat(wqkv), "bqkv": vec(bqkv),
        "wo": mat(stk("wo")), "bo": vec(stk("bo")),
        "g1": vec(stk("g1")), "be1": vec(stk("be1")),
        "w1": mat(stk("w1")), "bf1": vec(stk("bf1")),
        "w2": mat(stk("w2")), "bf2": vec(stk("bf2")),
        "g2": vec(stk("g2")), "be2": vec(stk("be2")),
        "norm_g": params["norm_g"].reshape(1, H).astype(jnp.float32),
        "norm_b": params["norm_b"].reshape(1, H).astype(jnp.float32),
    }


def _fused_call(src, add_mask, stacked, num_head, compute_dtype):
    B, S, Dsrc = src.shape
    H = stacked["mapper_w"].shape[1]
    L = stacked["wqkv"].shape[0]
    head_dim = H // num_head

    invariant = (stacked["mapper_w"], stacked["pos_b"])
    per_layer = tuple(stacked[k] for k in
                      ("wqkv", "bqkv", "wo", "bo",
                       "g1", "be1", "w1", "bf1", "w2", "bf2", "g2", "be2"))
    final = (stacked["norm_g"], stacked["norm_b"])

    in_specs = ([pl.BlockSpec((1, S, Dsrc), lambda b, l: (b, 0, 0)),
                 pl.BlockSpec((1, 1, S), lambda b, l: (b, 0, 0))]
                + [_invariant_spec(a) for a in invariant]
                + [_layer_spec(a) for a in per_layer]
                + [_invariant_spec(a) for a in final])

    kernel = _make_fused_kernel(num_head, head_dim, H, compute_dtype)

    # TODO(synk): for very large H/ffm/S on v7x (64 MiB VMEM), additionally
    # chunk the FFN contraction and tile S; not needed at these model sizes.
    return pl.pallas_call(
        kernel,
        out_shape=jax.ShapeDtypeStruct((B, S, H), jnp.float32),
        grid=(B, L),
        in_specs=in_specs,
        out_specs=pl.BlockSpec((1, S, H), lambda b, l: (b, 0, 0)),
        scratch_shapes=[pltpu.VMEM((S, H), jnp.float32)],
        compiler_params=pltpu.CompilerParams(
            dimension_semantics=("parallel", "arbitrary"),
            vmem_limit_bytes=32 * 1024 * 1024),
    )(src, add_mask, *invariant, *per_layer, *final)


def video_encoder_forward(src, src_key_padding_mask, params, arch="Tr_Enc",
                          num_head=4, compute_dtype=jnp.float32):
    """Pallas implementation of Video_Encoder.forward (eval mode)."""
    if arch is None:
        return src
    if arch == "Tr_Enc":
        B, S, _ = src.shape
        if src_key_padding_mask is None:
            add_mask = jnp.zeros((B, 1, S), jnp.float32)
        else:
            add_mask = jnp.where(src_key_padding_mask, -1e9, 0.0).astype(
                jnp.float32).reshape(B, 1, S)
        stacked = _prepare_params(params, S, num_head, compute_dtype)
        return _fused_call(src.astype(jnp.float32), add_mask, stacked,
                           num_head, compute_dtype)
    # TODO(synk): 'LSTM_Enc' branch (pack_sequence + variable-length nn.LSTM)
    # has no clean static Pallas equivalent; not implemented.
    raise NotImplementedError(arch)


# --------------------------- params & reference ------------------------------

def init_params(key, src_dim, hidden, ffm, num_layer, v_max_length):
    keys = iter(jax.random.split(key, 8 + 8 * num_layer))

    def w(shape):
        return 0.02 * jax.random.normal(next(keys), shape, jnp.float32)

    params = {
        "mapper_w": w((src_dim, hidden)),
        "mapper_b": jnp.zeros((hidden,), jnp.float32),
        # trunc_normal_(std=0.02) ~ normal clipped to +-2*std
        "pos_embed": jnp.clip(w((1, v_max_length, hidden)), -0.04, 0.04),
        "norm_g": jnp.ones((hidden,), jnp.float32),
        "norm_b": jnp.zeros((hidden,), jnp.float32),
        "layers": [],
    }
    for _ in range(num_layer):
        params["layers"].append({
            "wq": w((hidden, hidden)), "bq": jnp.zeros((hidden,), jnp.float32),
            "wk": w((hidden, hidden)), "bk": jnp.zeros((hidden,), jnp.float32),
            "wv": w((hidden, hidden)), "bv": jnp.zeros((hidden,), jnp.float32),
            "wo": w((hidden, hidden)), "bo": jnp.zeros((hidden,), jnp.float32),
            "g1": jnp.ones((hidden,), jnp.float32), "be1": jnp.zeros((hidden,), jnp.float32),
            "w1": w((hidden, ffm)), "bf1": jnp.zeros((ffm,), jnp.float32),
            "w2": w((ffm, hidden)), "bf2": jnp.zeros((hidden,), jnp.float32),
            "g2": jnp.ones((hidden,), jnp.float32), "be2": jnp.zeros((hidden,), jnp.float32),
        })
    return params


def reference_forward(src, key_padding_mask, params, num_head):
    """Pure-jnp reference mirroring PyTorch Tr_Enc semantics (eval mode)."""
    def ln(y, g, b):
        mu = y.mean(-1, keepdims=True)
        var = ((y - mu) ** 2).mean(-1, keepdims=True)
        return (y - mu) / jnp.sqrt(var + EPS) * g + b

    S = src.shape[1]
    x = src @ params["mapper_w"] + params["mapper_b"] + params["pos_embed"][:, :S]
    B, S, H = x.shape
    hd = H // num_head
    add = jnp.where(key_padding_mask, -1e9, 0.0)[:, None, None, :]
    for p in params["layers"]:
        q = (x @ p["wq"] + p["bq"]).reshape(B, S, num_head, hd).transpose(0, 2, 1, 3)
        k = (x @ p["wk"] + p["bk"]).reshape(B, S, num_head, hd).transpose(0, 2, 1, 3)
        v = (x @ p["wv"] + p["bv"]).reshape(B, S, num_head, hd).transpose(0, 2, 1, 3)
        s = jnp.einsum("bhqd,bhkd->bhqk", q, k) / (hd ** 0.5) + add
        a = jax.nn.softmax(s, axis=-1)
        o = jnp.einsum("bhqk,bhkd->bhqd", a, v).transpose(0, 2, 1, 3).reshape(B, S, H)
        o = o @ p["wo"] + p["bo"]
        x = ln(x + o, p["g1"], p["be1"])
        h = jnp.maximum(x @ p["w1"] + p["bf1"], 0.0)
        x = ln(x + h @ p["w2"] + p["bf2"], p["g2"], p["be2"])
    return ln(x, params["norm_g"], params["norm_b"])


# --------------------------- main --------------------------------------------

if __name__ == "__main__":
    B, S = 2, 8                       # v_max_length = 8 for the synthetic test
    src_dim, hidden, ffm = 16, 32, 64
    num_head, num_layer = 4, 2

    key = jax.random.PRNGKey(0)
    k_params, k_src = jax.random.split(key)
    params = init_params(k_params, src_dim, hidden, ffm, num_layer, S)

    src = jax.random.normal(k_src, (B, S, src_dim), jnp.float32)
    # second batch element has the last two positions padded
    pad_mask = jnp.array([[False] * S,
                          [False] * (S - 2) + [True] * 2])

    # f32 matmul-operand path: bit-faithful to the PyTorch eval forward
    out = video_encoder_forward(src, pad_mask, params, arch="Tr_Enc",
                                num_head=num_head)
    out = jax.block_until_ready(out)
    ref = reference_forward(src, pad_mask, params, num_head)
    assert out.shape == (B, S, hidden)
    err = float(jnp.max(jnp.abs(out - ref)))
    assert err < 1e-4, f"f32 mismatch vs reference: {err}"

    # bf16 matmul-operand path (f32 accumulation / softmax / LayerNorm stats)
    out_bf16 = video_encoder_forward(src, pad_mask, params, arch="Tr_Enc",
                                     num_head=num_head,
                                     compute_dtype=jnp.bfloat16)
    out_bf16 = jax.block_until_ready(out_bf16)
    assert bool(jnp.all(jnp.isfinite(out_bf16)))
    err_bf16 = float(jnp.max(jnp.abs(out_bf16 - ref)))
    assert err_bf16 < 0.5, f"bf16 path diverged: {err_bf16}"

    # arch=None path: identity
    assert jnp.array_equal(video_encoder_forward(src, None, params, arch=None), src)

    print("KERNEL_OK")
</pallas_src>

<mosaic_0001>
module attributes {stable_mosaic.version = 11 : i64} {
  func.func @kernel(%arg0: i32, %arg1: i32, %arg2: memref<1x8x16xf32, #tpu.memory_space<vmem>>, %arg3: memref<1x1x8xf32, #tpu.memory_space<vmem>>, %arg4: memref<16x32xf32, #tpu.memory_space<vmem>>, %arg5: memref<1x8x32xf32, #tpu.memory_space<vmem>>, %arg6: memref<1x32x96xf32, #tpu.memory_space<vmem>>, %arg7: memref<1x1x96xf32, #tpu.memory_space<vmem>>, %arg8: memref<1x32x32xf32, #tpu.memory_space<vmem>>, %arg9: memref<1x1x32xf32, #tpu.memory_space<vmem>>, %arg10: memref<1x1x32xf32, #tpu.memory_space<vmem>>, %arg11: memref<1x1x32xf32, #tpu.memory_space<vmem>>, %arg12: memref<1x32x64xf32, #tpu.memory_space<vmem>>, %arg13: memref<1x1x64xf32, #tpu.memory_space<vmem>>, %arg14: memref<1x64x32xf32, #tpu.memory_space<vmem>>, %arg15: memref<1x1x32xf32, #tpu.memory_space<vmem>>, %arg16: memref<1x1x32xf32, #tpu.memory_space<vmem>>, %arg17: memref<1x1x32xf32, #tpu.memory_space<vmem>>, %arg18: memref<1x32xf32, #tpu.memory_space<vmem>>, %arg19: memref<1x32xf32, #tpu.memory_space<vmem>>, %arg20: memref<1x8x32xf32, #tpu.memory_space<vmem>>, %arg21: memref<8x32xf32, #tpu.memory_space<vmem>>) attributes {dimension_semantics = [#tpu.dimension_semantics<parallel>, #tpu.dimension_semantics<arbitrary>], iteration_bounds = array<i64: 2, 2>, scalar_prefetch = 0 : i64, scratch_operands = 1 : i64, tpu.core_type = #tpu.core_type<tc>, window_params = [{transform_indices = @transform_0, window_bounds = array<i64: 1, 8, 16>}, {transform_indices = @transform_1, window_bounds = array<i64: 1, 1, 8>}, {pipeline_mode = #tpu.pipeline_mode<synchronous>, transform_indices = @transform_2, window_bounds = array<i64: 16, 32>}, {pipeline_mode = #tpu.pipeline_mode<synchronous>, transform_indices = @transform_3, window_bounds = array<i64: 1, 8, 32>}, {transform_indices = @transform_4, window_bounds = array<i64: 1, 32, 96>}, {transform_indices = @transform_5, window_bounds = array<i64: 1, 1, 96>}, {transform_indices = @transform_6, window_bounds = array<i64: 1, 32, 32>}, {transform_indices = @transform_7, window_bounds = array<i64: 1, 1, 32>}, {transform_indices = @transform_8, window_bounds = array<i64: 1, 1, 32>}, {transform_indices = @transform_9, window_bounds = array<i64: 1, 1, 32>}, {transform_indices = @transform_10, window_bounds = array<i64: 1, 32, 64>}, {transform_indices = @transform_11, window_bounds = array<i64: 1, 1, 64>}, {transform_indices = @transform_12, window_bounds = array<i64: 1, 64, 32>}, {transform_indices = @transform_13, window_bounds = array<i64: 1, 1, 32>}, {transform_indices = @transform_14, window_bounds = array<i64: 1, 1, 32>}, {transform_indices = @transform_15, window_bounds = array<i64: 1, 1, 32>}, {pipeline_mode = #tpu.pipeline_mode<synchronous>, transform_indices = @transform_16, window_bounds = array<i64: 1, 32>}, {pipeline_mode = #tpu.pipeline_mode<synchronous>, transform_indices = @transform_17, window_bounds = array<i64: 1, 32>}, {transform_indices = @transform_18, window_bounds = array<i64: 1, 8, 32>}]} {
    %c0_i32 = arith.constant 0 : i32
    %0 = arith.cmpi eq, %arg1, %c0_i32 : i32
    %1 = arith.extui %0 : i1 to i32
    %c0_i32_0 = arith.constant 0 : i32
    %2 = arith.cmpi ne, %1, %c0_i32_0 : i32
    scf.if %2 {
      %c0_74 = arith.constant 0 : index
      %c0_75 = arith.constant 0 : index
      %c0_76 = arith.constant 0 : index
      %163 = vector.load %arg2[%c0_74, %c0_75, %c0_76] : memref<1x8x16xf32, #tpu.memory_space<vmem>>, vector<1x8x16xf32>
      %164 = vector.shape_cast %163 : vector<1x8x16xf32> to vector<8x16xf32>
      %c0_77 = arith.constant 0 : index
      %c0_78 = arith.constant 0 : index
      %165 = vector.load %arg4[%c0_77, %c0_78] : memref<16x32xf32, #tpu.memory_space<vmem>>, vector<16x32xf32>
      %cst_79 = arith.constant dense<0.000000e+00> : vector<8x32xf32>
      %166 = tpu.matmul %164, %165, %cst_79 {dimension_numbers = #tpu.dot_dimension_numbers<[1], [0], [0], [1], [0, 0, 1, 1], [], []>} : vector<8x16xf32>, vector<16x32xf32>, vector<8x32xf32> -> vector<8x32xf32>
      %c0_80 = arith.constant 0 : index
      %c0_81 = arith.constant 0 : index
      %c0_82 = arith.constant 0 : index
      %167 = vector.load %arg5[%c0_80, %c0_81, %c0_82] : memref<1x8x32xf32, #tpu.memory_space<vmem>>, vector<1x8x32xf32>
      %168 = vector.shape_cast %167 : vector<1x8x32xf32> to vector<8x32xf32>
      %169 = arith.addf %166, %168 : vector<8x32xf32>
      %c0_83 = arith.constant 0 : index
      %c0_84 = arith.constant 0 : index
      %170 = vector.load %arg21[%c0_83, %c0_84] : memref<8x32xf32, #tpu.memory_space<vmem>>, vector<8x32xf32>
      tpu.vector_store %arg21[%c0_83, %c0_84], %169 {strides = array<i32>} : memref<8x32xf32, #tpu.memory_space<vmem>>, vector<8x32xf32>,
    } else {
    }
    %c0 = arith.constant 0 : index
    %c0_1 = arith.constant 0 : index
    %3 = vector.load %arg21[%c0, %c0_1] : memref<8x32xf32, #tpu.memory_space<vmem>>, vector<8x32xf32>
    %c0_2 = arith.constant 0 : index
    %c0_3 = arith.constant 0 : index
    %c0_4 = arith.constant 0 : index
    %4 = vector.load %arg3[%c0_2, %c0_3, %c0_4] : memref<1x1x8xf32, #tpu.memory_space<vmem>>, vector<1x1x8xf32>
    %5 = vector.shape_cast %4 : vector<1x1x8xf32> to vector<1x8xf32>
    %c0_5 = arith.constant 0 : index
    %c0_6 = arith.constant 0 : index
    %c0_7 = arith.constant 0 : index
    %6 = vector.load %arg6[%c0_5, %c0_6, %c0_7] : memref<1x32x96xf32, #tpu.memory_space<vmem>>, vector<1x32x96xf32>
    %7 = vector.shape_cast %6 : vector<1x32x96xf32> to vector<32x96xf32>
    %cst = arith.constant dense<0.000000e+00> : vector<8x96xf32>
    %8 = tpu.matmul %3, %7, %cst {dimension_numbers = #tpu.dot_dimension_numbers<[1], [0], [0], [1], [0, 0, 1, 1], [], []>} : vector<8x32xf32>, vector<32x96xf32>, vector<8x96xf32> -> vector<8x96xf32>
    %c0_8 = arith.constant 0 : index
    %c0_9 = arith.constant 0 : index
    %c0_10 = arith.constant 0 : index
    %9 = vector.load %arg7[%c0_8, %c0_9, %c0_10] : memref<1x1x96xf32, #tpu.memory_space<vmem>>, vector<1x1x96xf32>
    %10 = vector.shape_cast %9 : vector<1x1x96xf32> to vector<1x96xf32>
    %11 = vector.broadcast %10 : vector<1x96xf32> to vector<8x96xf32>
    %12 = arith.addf %8, %11 : vector<8x96xf32>
    %13 = vector.extract_strided_slice %12 {offsets = [0, 0], sizes = [8, 8], strides = [1, 1]} : vector<8x96xf32> to vector<8x8xf32>
    %14 = vector.extract_strided_slice %12 {offsets = [0, 32], sizes = [8, 8], strides = [1, 1]} : vector<8x96xf32> to vector<8x8xf32>
    %15 = vector.extract_strided_slice %12 {offsets = [0, 64], sizes = [8, 8], strides = [1, 1]} : vector<8x96xf32> to vector<8x8xf32>
    %cst_11 = arith.constant dense<0.000000e+00> : vector<8x8xf32>
    %16 = tpu.matmul %13, %14, %cst_11 {dimension_numbers = #tpu.dot_dimension_numbers<[1], [1], [0], [0], [0, 0, 1, 0], [], []>} : vector<8x8xf32>, vector<8x8xf32>, vector<8x8xf32> -> vector<8x8xf32>
    %17 = vector.broadcast %5 : vector<1x8xf32> to vector<8x8xf32>
    %18 = arith.addf %16, %17 : vector<8x8xf32>
    %cst_12 = arith.constant dense<0xFF800000> : vector<8xf32>
    %19 = vector.multi_reduction <maximumf>, %18, %cst_12 [1] : vector<8x8xf32> to vector<8xf32>
    %20 = vector.shape_cast %19 : vector<8xf32> to vector<8x1xf32>
    %21 = vector.broadcast %20 : vector<8x1xf32> to vector<8x8xf32>
    %22 = arith.subf %18, %21 : vector<8x8xf32>
    %23 = math.exp %22 : vector<8x8xf32>
    %cst_13 = arith.constant dense<0.000000e+00> : vector<8xf32>
    %24 = vector.multi_reduction <add>, %23, %cst_13 [1] : vector<8x8xf32> to vector<8xf32>
    %25 = vector.shape_cast %24 : vector<8xf32> to vector<8x1xf32>
    %26 = tpu.reciprocal %25 : vector<8x1xf32> -> vector<8x1xf32>
    %27 = vector.broadcast %26 : vector<8x1xf32> to vector<8x8xf32>
    %28 = arith.mulf %23, %27 : vector<8x8xf32>
    %cst_14 = arith.constant dense<0.000000e+00> : vector<8x8xf32>
    %29 = tpu.matmul %28, %15, %cst_14 {dimension_numbers = #tpu.dot_dimension_numbers<[1], [0], [0], [1], [0, 0, 1, 1], [], []>} : vector<8x8xf32>, vector<8x8xf32>, vector<8x8xf32> -> vector<8x8xf32>
    %30 = vector.extract_strided_slice %12 {offsets = [0, 8], sizes = [8, 8], strides = [1, 1]} : vector<8x96xf32> to vector<8x8xf32>
    %31 = vector.extract_strided_slice %12 {offsets = [0, 40], sizes = [8, 8], strides = [1, 1]} : vector<8x96xf32> to vector<8x8xf32>
    %32 = vector.extract_strided_slice %12 {offsets = [0, 72], sizes = [8, 8], strides = [1, 1]} : vector<8x96xf32> to vector<8x8xf32>
    %cst_15 = arith.constant dense<0.000000e+00> : vector<8x8xf32>
    %33 = tpu.matmul %30, %31, %cst_15 {dimension_numbers = #tpu.dot_dimension_numbers<[1], [1], [0], [0], [0, 0, 1, 0], [], []>} : vector<8x8xf32>, vector<8x8xf32>, vector<8x8xf32> -> vector<8x8xf32>
    %34 = vector.broadcast %5 : vector<1x8xf32> to vector<8x8xf32>
    %35 = arith.addf %33, %34 : vector<8x8xf32>
    %cst_16 = arith.constant dense<0xFF800000> : vector<8xf32>
    %36 = vector.multi_reduction <maximumf>, %35, %cst_16 [1] : vector<8x8xf32> to vector<8xf32>
    %37 = vector.shape_cast %36 : vector<8xf32> to vector<8x1xf32>
    %38 = vector.broadcast %37 : vector<8x1xf32> to vector<8x8xf32>
    %39 = arith.subf %35, %38 : vector<8x8xf32>
    %40 = math.exp %39 : vector<8x8xf32>
    %cst_17 = arith.constant dense<0.000000e+00> : vector<8xf32>
    %41 = vector.multi_reduction <add>, %40, %cst_17 [1] : vector<8x8xf32> to vector<8xf32>
    %42 = vector.shape_cast %41 : vector<8xf32> to vector<8x1xf32>
    %43 = tpu.reciprocal %42 : vector<8x1xf32> -> vector<8x1xf32>
    %44 = vector.broadcast %43 : vector<8x1xf32> to vector<8x8xf32>
    %45 = arith.mulf %40, %44 : vector<8x8xf32>
    %cst_18 = arith.constant dense<0.000000e+00> : vector<8x8xf32>
    %46 = tpu.matmul %45, %32, %cst_18 {dimension_numbers = #tpu.dot_dimension_numbers<[1], [0], [0], [1], [0, 0, 1, 1], [], []>} : vector<8x8xf32>, vector<8x8xf32>, vector<8x8xf32> -> vector<8x8xf32>
    %47 = vector.extract_strided_slice %12 {offsets = [0, 16], sizes = [8, 8], strides = [1, 1]} : vector<8x96xf32> to vector<8x8xf32>
    %48 = vector.extract_strided_slice %12 {offsets = [0, 48], sizes = [8, 8], strides = [1, 1]} : vector<8x96xf32> to vector<8x8xf32>
    %49 = vector.extract_strided_slice %12 {offsets = [0, 80], sizes = [8, 8], strides = [1, 1]} : vector<8x96xf32> to vector<8x8xf32>
    %cst_19 = arith.constant dense<0.000000e+00> : vector<8x8xf32>
    %50 = tpu.matmul %47, %48, %cst_19 {dimension_numbers = #tpu.dot_dimension_numbers<[1], [1], [0], [0], [0, 0, 1, 0], [], []>} : vector<8x8xf32>, vector<8x8xf32>, vector<8x8xf32> -> vector<8x8xf32>
    %51 = vector.broadcast %5 : vector<1x8xf32> to vector<8x8xf32>
    %52 = arith.addf %50, %51 : vector<8x8xf32>
    %cst_20 = arith.constant dense<0xFF800000> : vector<8xf32>
    %53 = vector.multi_reduction <maximumf>, %52, %cst_20 [1] : vector<8x8xf32> to vector<8xf32>
    %54 = vector.shape_cast %53 : vector<8xf32> to vector<8x1xf32>
    %55 = vector.broadcast %54 : vector<8x1xf32> to vector<8x8xf32>
    %56 = arith.subf %52, %55 : vector<8x8xf32>
    %57 = math.exp %56 : vector<8x8xf32>
    %cst_21 = arith.constant dense<0.000000e+00> : vector<8xf32>
    %58 = vector.multi_reduction <add>, %57, %cst_21 [1] : vector<8x8xf32> to vector<8xf32>
    %59 = vector.shape_cast %58 : vector<8xf32> to vector<8x1xf32>
    %60 = tpu.reciprocal %59 : vector<8x1xf32> -> vector<8x1xf32>
    %61 = vector.broadcast %60 : vector<8x1xf32> to vector<8x8xf32>
    %62 = arith.mulf %57, %61 : vector<8x8xf32>
    %cst_22 = arith.constant dense<0.000000e+00> : vector<8x8xf32>
    %63 = tpu.matmul %62, %49, %cst_22 {dimension_numbers = #tpu.dot_dimension_numbers<[1], [0], [0], [1], [0, 0, 1, 1], [], []>} : vector<8x8xf32>, vector<8x8xf32>, vector<8x8xf32> -> vector<8x8xf32>
    %64 = vector.extract_strided_slice %12 {offsets = [0, 24], sizes = [8, 8], strides = [1, 1]} : vector<8x96xf32> to vector<8x8xf32>
    %65 = vector.extract_strided_slice %12 {offsets = [0, 56], sizes = [8, 8], strides = [1, 1]} : vector<8x96xf32> to vector<8x8xf32>
    %66 = vector.extract_strided_slice %12 {offsets = [0, 88], sizes = [8, 8], strides = [1, 1]} : vector<8x96xf32> to vector<8x8xf32>
    %cst_23 = arith.constant dense<0.000000e+00> : vector<8x8xf32>
    %67 = tpu.matmul %64, %65, %cst_23 {dimension_numbers = #tpu.dot_dimension_numbers<[1], [1], [0], [0], [0, 0, 1, 0], [], []>} : vector<8x8xf32>, vector<8x8xf32>, vector<8x8xf32> -> vector<8x8xf32>
    %68 = vector.broadcast %5 : vector<1x8xf32> to vector<8x8xf32>
    %69 = arith.addf %67, %68 : vector<8x8xf32>
    %cst_24 = arith.constant dense<0xFF800000> : vector<8xf32>
    %70 = vector.multi_reduction <maximumf>, %69, %cst_24 [1] : vector<8x8xf32> to vector<8xf32>
    %71 = vector.shape_cast %70 : vector<8xf32> to vector<8x1xf32>
    %72 = vector.broadcast %71 : vector<8x1xf32> to vector<8x8xf32>
    %73 = arith.subf %69, %72 : vector<8x8xf32>
    %74 = math.exp %73 : vector<8x8xf32>
    %cst_25 = arith.constant dense<0.000000e+00> : vector<8xf32>
    %75 = vector.multi_reduction <add>, %74, %cst_25 [1] : vector<8x8xf32> to vector<8xf32>
    %76 = vector.shape_cast %75 : vector<8xf32> to vector<8x1xf32>
    %77 = tpu.reciprocal %76 : vector<8x1xf32> -> vector<8x1xf32>
    %78 = vector.broadcast %77 : vector<8x1xf32> to vector<8x8xf32>
    %79 = arith.mulf %74, %78 : vector<8x8xf32>
    %cst_26 = arith.constant dense<0.000000e+00> : vector<8x8xf32>
    %80 = tpu.matmul %79, %66, %cst_26 {dimension_numbers = #tpu.dot_dimension_numbers<[1], [0], [0], [1], [0, 0, 1, 1], [], []>} : vector<8x8xf32>, vector<8x8xf32>, vector<8x8xf32> -> vector<8x8xf32>
    %81 = tpu.concatenate %29, %46, %63, %80 in 1 : vector<8x8xf32>, vector<8x8xf32>, vector<8x8xf32>, vector<8x8xf32> -> vector<8x32xf32>
    %c0_27 = arith.constant 0 : index
    %c0_28 = arith.constant 0 : index
    %c0_29 = arith.constant 0 : index
    %82 = vector.load %arg8[%c0_27, %c0_28, %c0_29] : memref<1x32x32xf32, #tpu.memory_space<vmem>>, vector<1x32x32xf32>
    %83 = vector.shape_cast %82 : vector<1x32x32xf32> to vector<32x32xf32>
    %cst_30 = arith.constant dense<0.000000e+00> : vector<8x32xf32>
    %84 = tpu.matmul %81, %83, %cst_30 {dimension_numbers = #tpu.dot_dimension_numbers<[1], [0], [0], [1], [0, 0, 1, 1], [], []>} : vector<8x32xf32>, vector<32x32xf32>, vector<8x32xf32> -> vector<8x32xf32>
    %c0_31 = arith.constant 0 : index
    %c0_32 = arith.constant 0 : index
    %c0_33 = arith.constant 0 : index
    %85 = vector.load %arg9[%c0_31, %c0_32, %c0_33] : memref<1x1x32xf32, #tpu.memory_space<vmem>>, vector<1x1x32xf32>
    %86 = vector.shape_cast %85 : vector<1x1x32xf32> to vector<1x32xf32>
    %87 = vector.broadcast %86 : vector<1x32xf32> to vector<8x32xf32>
    %88 = arith.addf %84, %87 : vector<8x32xf32>
    %89 = arith.addf %3, %88 : vector<8x32xf32>
    %c0_34 = arith.constant 0 : index
    %c0_35 = arith.constant 0 : index
    %c0_36 = arith.constant 0 : index
    %90 = vector.load %arg10[%c0_34, %c0_35, %c0_36] : memref<1x1x32xf32, #tpu.memory_space<vmem>>, vector<1x1x32xf32>
    %91 = vector.shape_cast %90 : vector<1x1x32xf32> to vector<1x32xf32>
    %c0_37 = arith.constant 0 : index
    %c0_38 = arith.constant 0 : index
    %c0_39 = arith.constant 0 : index
    %92 = vector.load %arg11[%c0_37, %c0_38, %c0_39] : memref<1x1x32xf32, #tpu.memory_space<vmem>>, vector<1x1x32xf32>
    %93 = vector.shape_cast %92 : vector<1x1x32xf32> to vector<1x32xf32>
    %cst_40 = arith.constant dense<0.000000e+00> : vector<8xf32>
    %94 = vector.multi_reduction <add>, %89, %cst_40 [1] : vector<8x32xf32> to vector<8xf32>
    %95 = vector.shape_cast %94 : vector<8xf32> to vector<8x1xf32>
    %cst_41 = arith.constant 3.200000e+01 : f32
    %96 = vector.broadcast %cst_41 : f32 to vector<8x1xf32>
    %97 = arith.divf %95, %96 : vector<8x1xf32>
    %98 = vector.broadcast %97 : vector<8x1xf32> to vector<8x32xf32>
    %99 = arith.subf %89, %98 : vector<8x32xf32>
    %100 = arith.mulf %99, %99 : vector<8x32xf32>
    %cst_42 = arith.constant dense<0.000000e+00> : vector<8xf32>
    %101 = vector.multi_reduction <add>, %100, %cst_42 [1] : vector<8x32xf32> to vector<8xf32>
    %102 = vector.shape_cast %101 : vector<8xf32> to vector<8x1xf32>
    %cst_43 = arith.constant 3.200000e+01 : f32
    %103 = vector.broadcast %cst_43 : f32 to vector<8x1xf32>
    %104 = arith.divf %102, %103 : vector<8x1xf32>
    %105 = vector.broadcast %97 : vector<8x1xf32> to vector<8x32xf32>
    %106 = arith.subf %89, %105 : vector<8x32xf32>
    %cst_44 = arith.constant 9.99999974E-6 : f32
    %107 = vector.broadcast %cst_44 : f32 to vector<8x1xf32>
    %108 = arith.addf %104, %107 : vector<8x1xf32>
    %109 = math.rsqrt %108 : vector<8x1xf32>
    %110 = vector.broadcast %109 : vector<8x1xf32> to vector<8x32xf32>
    %111 = arith.mulf %106, %110 : vector<8x32xf32>
    %112 = vector.broadcast %91 : vector<1x32xf32> to vector<8x32xf32>
    %113 = arith.mulf %111, %112 : vector<8x32xf32>
    %114 = vector.broadcast %93 : vector<1x32xf32> to vector<8x32xf32>
    %115 = arith.addf %113, %114 : vector<8x32xf32>
    %c0_45 = arith.constant 0 : index
    %c0_46 = arith.constant 0 : index
    %c0_47 = arith.constant 0 : index
    %116 = vector.load %arg12[%c0_45, %c0_46, %c0_47] : memref<1x32x64xf32, #tpu.memory_space<vmem>>, vector<1x32x64xf32>
    %117 = vector.shape_cast %116 : vector<1x32x64xf32> to vector<32x64xf32>
    %cst_48 = arith.constant dense<0.000000e+00> : vector<8x64xf32>
    %118 = tpu.matmul %115, %117, %cst_48 {dimension_numbers = #tpu.dot_dimension_numbers<[1], [0], [0], [1], [0, 0, 1, 1], [], []>} : vector<8x32xf32>, vector<32x64xf32>, vector<8x64xf32> -> vector<8x64xf32>
    %c0_49 = arith.constant 0 : index
    %c0_50 = arith.constant 0 : index
    %c0_51 = arith.constant 0 : index
    %119 = vector.load %arg13[%c0_49, %c0_50, %c0_51] : memref<1x1x64xf32, #tpu.memory_space<vmem>>, vector<1x1x64xf32>
    %120 = vector.shape_cast %119 : vector<1x1x64xf32> to vector<1x64xf32>
    %121 = vector.broadcast %120 : vector<1x64xf32> to vector<8x64xf32>
    %122 = arith.addf %118, %121 : vector<8x64xf32>
    %cst_52 = arith.constant 0.000000e+00 : f32
    %123 = vector.broadcast %cst_52 : f32 to vector<8x64xf32>
    %124 = arith.maximumf %122, %123 : vector<8x64xf32>
    %c0_53 = arith.constant 0 : index
    %c0_54 = arith.constant 0 : index
    %c0_55 = arith.constant 0 : index
    %125 = vector.load %arg14[%c0_53, %c0_54, %c0_55] : memref<1x64x32xf32, #tpu.memory_space<vmem>>, vector<1x64x32xf32>
    %126 = vector.shape_cast %125 : vector<1x64x32xf32> to vector<64x32xf32>
    %cst_56 = arith.constant dense<0.000000e+00> : vector<8x32xf32>
    %127 = tpu.matmul %124, %126, %cst_56 {dimension_numbers = #tpu.dot_dimension_numbers<[1], [0], [0], [1], [0, 0, 1, 1], [], []>} : vector<8x64xf32>, vector<64x32xf32>, vector<8x32xf32> -> vector<8x32xf32>
    %c0_57 = arith.constant 0 : index
    %c0_58 = arith.constant 0 : index
    %c0_59 = arith.constant 0 : index
    %128 = vector.load %arg15[%c0_57, %c0_58, %c0_59] : memref<1x1x32xf32, #tpu.memory_space<vmem>>, vector<1x1x32xf32>
    %129 = vector.shape_cast %128 : vector<1x1x32xf32> to vector<1x32xf32>
    %130 = vector.broadcast %129 : vector<1x32xf32> to vector<8x32xf32>
    %131 = arith.addf %127, %130 : vector<8x32xf32>
    %132 = arith.addf %115, %131 : vector<8x32xf32>
    %c0_60 = arith.constant 0 : index
    %c0_61 = arith.constant 0 : index
    %c0_62 = arith.constant 0 : index
    %133 = vector.load %arg16[%c0_60, %c0_61, %c0_62] : memref<1x1x32xf32, #tpu.memory_space<vmem>>, vector<1x1x32xf32>
    %134 = vector.shape_cast %133 : vector<1x1x32xf32> to vector<1x32xf32>
    %c0_63 = arith.constant 0 : index
    %c0_64 = arith.constant 0 : index
    %c0_65 = arith.constant 0 : index
    %135 = vector.load %arg17[%c0_63, %c0_64, %c0_65] : memref<1x1x32xf32, #tpu.memory_space<vmem>>, vector<1x1x32xf32>
    %136 = vector.shape_cast %135 : vector<1x1x32xf32> to vector<1x32xf32>
    %cst_66 = arith.constant dense<0.000000e+00> : vector<8xf32>
    %137 = vector.multi_reduction <add>, %132, %cst_66 [1] : vector<8x32xf32> to vector<8xf32>
    %138 = vector.shape_cast %137 : vector<8xf32> to vector<8x1xf32>
    %cst_67 = arith.constant 3.200000e+01 : f32
    %139 = vector.broadcast %cst_67 : f32 to vector<8x1xf32>
    %140 = arith.divf %138, %139 : vector<8x1xf32>
    %141 = vector.broadcast %140 : vector<8x1xf32> to vector<8x32xf32>
    %142 = arith.subf %132, %141 : vector<8x32xf32>
    %143 = arith.mulf %142, %142 : vector<8x32xf32>
    %cst_68 = arith.constant dense<0.000000e+00> : vector<8xf32>
    %144 = vector.multi_reduction <add>, %143, %cst_68 [1] : vector<8x32xf32> to vector<8xf32>
    %145 = vector.shape_cast %144 : vector<8xf32> to vector<8x1xf32>
    %cst_69 = arith.constant 3.200000e+01 : f32
    %146 = vector.broadcast %cst_69 : f32 to vector<8x1xf32>
    %147 = arith.divf %145, %146 : vector<8x1xf32>
    %148 = vector.broadcast %140 : vector<8x1xf32> to vector<8x32xf32>
    %149 = arith.subf %132, %148 : vector<8x32xf32>
    %cst_70 = arith.constant 9.99999974E-6 : f32
    %150 = vector.broadcast %cst_70 : f32 to vector<8x1xf32>
    %151 = arith.addf %147, %150 : vector<8x1xf32>
    %152 = math.rsqrt %151 : vector<8x1xf32>
    %153 = vector.broadcast %152 : vector<8x1xf32> to vector<8x32xf32>
    %154 = arith.mulf %149, %153 : vector<8x32xf32>
    %155 = vector.broadcast %134 : vector<1x32xf32> to vector<8x32xf32>
    %156 = arith.mulf %154, %155 : vector<8x32xf32>
    %157 = vector.broadcast %136 : vector<1x32xf32> to vector<8x32xf32>
    %158 = arith.addf %156, %157 : vector<8x32xf32>
    %c0_71 = arith.constant 0 : index
    %c0_72 = arith.constant 0 : index
    %159 = vector.load %arg21[%c0_71, %c0_72] : memref<8x32xf32, #tpu.memory_space<vmem>>, vector<8x32xf32>
    tpu.vector_store %arg21[%c0_71, %c0_72], %158 {strides = array<i32>} : memref<8x32xf32, #tpu.memory_space<vmem>>, vector<8x32xf32>,
    %c1_i32 = arith.constant 1 : i32
    %160 = arith.cmpi eq, %arg1, %c1_i32 : i32
    %161 = arith.extui %160 : i1 to i32
    %c0_i32_73 = arith.constant 0 : i32
    %162 = arith.cmpi ne, %161, %c0_i32_73 : i32
    scf.if %162 {
      %c0_74 = arith.constant 0 : index
      %c0_75 = arith.constant 0 : index
      %163 = vector.load %arg18[%c0_74, %c0_75] : memref<1x32xf32, #tpu.memory_space<vmem>>, vector<1x32xf32>
      %c0_76 = arith.constant 0 : index
      %c0_77 = arith.constant 0 : index
      %164 = vector.load %arg19[%c0_76, %c0_77] : memref<1x32xf32, #tpu.memory_space<vmem>>, vector<1x32xf32>
      %cst_78 = arith.constant dense<0.000000e+00> : vector<8xf32>
      %165 = vector.multi_reduction <add>, %158, %cst_78 [1] : vector<8x32xf32> to vector<8xf32>
      %166 = vector.shape_cast %165 : vector<8xf32> to vector<8x1xf32>
      %cst_79 = arith.constant 3.200000e+01 : f32
      %167 = vector.broadcast %cst_79 : f32 to vector<8x1xf32>
      %168 = arith.divf %166, %167 : vector<8x1xf32>
      %169 = vector.broadcast %168 : vector<8x1xf32> to vector<8x32xf32>
      %170 = arith.subf %158, %169 : vector<8x32xf32>
      %171 = arith.mulf %170, %170 : vector<8x32xf32>
      %cst_80 = arith.constant dense<0.000000e+00> : vector<8xf32>
      %172 = vector.multi_reduction <add>, %171, %cst_80 [1] : vector<8x32xf32> to vector<8xf32>
      %173 = vector.shape_cast %172 : vector<8xf32> to vector<8x1xf32>
      %cst_81 = arith.constant 3.200000e+01 : f32
      %174 = vector.broadcast %cst_81 : f32 to vector<8x1xf32>
      %175 = arith.divf %173, %174 : vector<8x1xf32>
      %176 = vector.broadcast %168 : vector<8x1xf32> to vector<8x32xf32>
      %177 = arith.subf %158, %176 : vector<8x32xf32>
      %cst_82 = arith.constant 9.99999974E-6 : f32
      %178 = vector.broadcast %cst_82 : f32 to vector<8x1xf32>
      %179 = arith.addf %175, %178 : vector<8x1xf32>
      %180 = math.rsqrt %179 : vector<8x1xf32>
      %181 = vector.broadcast %180 : vector<8x1xf32> to vector<8x32xf32>
      %182 = arith.mulf %177, %181 : vector<8x32xf32>
      %183 = vector.broadcast %163 : vector<1x32xf32> to vector<8x32xf32>
      %184 = arith.mulf %182, %183 : vector<8x32xf32>
      %185 = vector.broadcast %164 : vector<1x32xf32> to vector<8x32xf32>
      %186 = arith.addf %184, %185 : vector<8x32xf32>
      %c0_83 = arith.constant 0 : index
      %c0_84 = arith.constant 0 : index
      %c0_85 = arith.constant 0 : index
      %187 = vector.load %arg20[%c0_83, %c0_84, %c0_85] : memref<1x8x32xf32, #tpu.memory_space<vmem>>, vector<1x8x32xf32>
      %188 = vector.shape_cast %187 : vector<1x8x32xf32> to vector<8x32xf32>
      %189 = vector.shape_cast %186 : vector<8x32xf32> to vector<1x8x32xf32>
      tpu.vector_store %arg20[%c0_83, %c0_84, %c0_85], %189 {strides = array<i32>} : memref<1x8x32xf32, #tpu.memory_space<vmem>>, vector<1x8x32xf32>,
    } else {
    }
    return
  }
  func.func @transform_0(%arg0: i32, %arg1: i32) -> (i32, i32, i32) {
    %c0_i32 = arith.constant 0 : i32
    %c0_i32_0 = arith.constant 0 : i32
    %c0_i32_1 = arith.constant 0 : i32
    return %arg0, %c0_i32, %c0_i32_0 : i32, i32, i32
  }
  func.func @transform_1(%arg0: i32, %arg1: i32) -> (i32, i32, i32) {
    %c0_i32 = arith.constant 0 : i32
    %c0_i32_0 = arith.constant 0 : i32
    %c0_i32_1 = arith.constant 0 : i32
    return %arg0, %c0_i32, %c0_i32_0 : i32, i32, i32
  }
  func.func @transform_2(%arg0: i32, %arg1: i32) -> (i32, i32) {
    %c0_i32 = arith.constant 0 : i32
    %c0_i32_0 = arith.constant 0 : i32
    %c0_i32_1 = arith.constant 0 : i32
    return %c0_i32, %c0_i32_0 : i32, i32
  }
  func.func @transform_3(%arg0: i32, %arg1: i32) -> (i32, i32, i32) {
    %c0_i32 = arith.constant 0 : i32
    %c0_i32_0 = arith.constant 0 : i32
    %c0_i32_1 = arith.constant 0 : i32
    %c0_i32_2 = arith.constant 0 : i32
    return %c0_i32, %c0_i32_0, %c0_i32_1 : i32, i32, i32
  }
  func.func @transform_4(%arg0: i32, %arg1: i32) -> (i32, i32, i32) {
    %c0_i32 = arith.constant 0 : i32
    %c0_i32_0 = arith.constant 0 : i32
    %c0_i32_1 = arith.constant 0 : i32
    return %arg1, %c0_i32, %c0_i32_0 : i32, i32, i32
  }
  func.func @transform_5(%arg0: i32, %arg1: i32) -> (i32, i32, i32) {
    %c0_i32 = arith.constant 0 : i32
    %c0_i32_0 = arith.constant 0 : i32
    %c0_i32_1 = arith.constant 0 : i32
    return %arg1, %c0_i32, %c0_i32_0 : i32, i32, i32
  }
  func.func @transform_6(%arg0: i32, %arg1: i32) -> (i32, i32, i32) {
    %c0_i32 = arith.constant 0 : i32
    %c0_i32_0 = arith.constant 0 : i32
    %c0_i32_1 = arith.constant 0 : i32
    return %arg1, %c0_i32, %c0_i32_0 : i32, i32, i32
  }
  func.func @transform_7(%arg0: i32, %arg1: i32) -> (i32, i32, i32) {
    %c0_i32 = arith.constant 0 : i32
    %c0_i32_0 = arith.constant 0 : i32
    %c0_i32_1 = arith.constant 0 : i32
    return %arg1, %c0_i32, %c0_i32_0 : i32, i32, i32
  }
  func.func @transform_8(%arg0: i32, %arg1: i32) -> (i32, i32, i32) {
    %c0_i32 = arith.constant 0 : i32
    %c0_i32_0 = arith.constant 0 : i32
    %c0_i32_1 = arith.constant 0 : i32
    return %arg1, %c0_i32, %c0_i32_0 : i32, i32, i32
  }
  func.func @transform_9(%arg0: i32, %arg1: i32) -> (i32, i32, i32) {
    %c0_i32 = arith.constant 0 : i32
    %c0_i32_0 = arith.constant 0 : i32
    %c0_i32_1 = arith.constant 0 : i32
    return %arg1, %c0_i32, %c0_i32_0 : i32, i32, i32
  }
  func.func @transform_10(%arg0: i32, %arg1: i32) -> (i32, i32, i32) {
    %c0_i32 = arith.constant 0 : i32
    %c0_i32_0 = arith.constant 0 : i32
    %c0_i32_1 = arith.constant 0 : i32
    return %arg1, %c0_i32, %c0_i32_0 : i32, i32, i32
  }
  func.func @transform_11(%arg0: i32, %arg1: i32) -> (i32, i32, i32) {
    %c0_i32 = arith.constant 0 : i32
    %c0_i32_0 = arith.constant 0 : i32
    %c0_i32_1 = arith.constant 0 : i32
    return %arg1, %c0_i32, %c0_i32_0 : i32, i32, i32
  }
  func.func @transform_12(%arg0: i32, %arg1: i32) -> (i32, i32, i32) {
    %c0_i32 = arith.constant 0 : i32
    %c0_i32_0 = arith.constant 0 : i32
    %c0_i32_1 = arith.constant 0 : i32
    return %arg1, %c0_i32, %c0_i32_0 : i32, i32, i32
  }
  func.func @transform_13(%arg0: i32, %arg1: i32) -> (i32, i32, i32) {
    %c0_i32 = arith.constant 0 : i32
    %c0_i32_0 = arith.constant 0 : i32
    %c0_i32_1 = arith.constant 0 : i32
    return %arg1, %c0_i32, %c0_i32_0 : i32, i32, i32
  }
  func.func @transform_14(%arg0: i32, %arg1: i32) -> (i32, i32, i32) {
    %c0_i32 = arith.constant 0 : i32
    %c0_i32_0 = arith.constant 0 : i32
    %c0_i32_1 = arith.constant 0 : i32
    return %arg1, %c0_i32, %c0_i32_0 : i32, i32, i32
  }
  func.func @transform_15(%arg0: i32, %arg1: i32) -> (i32, i32, i32) {
    %c0_i32 = arith.constant 0 : i32
    %c0_i32_0 = arith.constant 0 : i32
    %c0_i32_1 = arith.constant 0 : i32
    return %arg1, %c0_i32, %c0_i32_0 : i32, i32, i32
  }
  func.func @transform_16(%arg0: i32, %arg1: i32) -> (i32, i32) {
    %c0_i32 = arith.constant 0 : i32
    %c0_i32_0 = arith.constant 0 : i32
    %c0_i32_1 = arith.constant 0 : i32
    return %c0_i32, %c0_i32_0 : i32, i32
  }
  func.func @transform_17(%arg0: i32, %arg1: i32) -> (i32, i32) {
    %c0_i32 = arith.constant 0 : i32
    %c0_i32_0 = arith.constant 0 : i32
    %c0_i32_1 = arith.constant 0 : i32
    return %c0_i32, %c0_i32_0 : i32, i32
  }
  func.func @transform_18(%arg0: i32, %arg1: i32) -> (i32, i32, i32) {
    %c0_i32 = arith.constant 0 : i32
    %c0_i32_0 = arith.constant 0 : i32
    %c0_i32_1 = arith.constant 0 : i32
    return %arg0, %c0_i32, %c0_i32_0 : i32, i32, i32
  }
}

</mosaic_0001>

<llo_original>
// kernel: tpu_custom_call.1
$region0: #{tpu_custom_call.1}
  #allocation0 [shape = 'u32[]', space=smem, size = 0x4, offset = 0x4, fixed_abs, tag = 'smem constant byte address 0x4 - core index']
  #allocation1 [shape = 'u32[144,128]{1,0:T(1,128)}', space=vmem, size = 0x12000, scoped, tag = 'internal scratch']
  #allocation2 [shape = 'f32[8,32]{1,0:T(8,128)}', space=vmem, size = 0x1000, scoped, tag = 'scratch operand']
  %s0 = inlined_call_operand.hbm [shape: f32[2,8,16], index: 0, kind: input, shape index: {}]
  %s1 = inlined_call_operand.vmem [shape: f32[2,1,8], index: 1, kind: input, shape index: {}]
  %s2 = inlined_call_operand.hbm [shape: f32[16,32], index: 2, kind: input, shape index: {}]
  %s3 = inlined_call_operand.vmem [shape: f32[1,8,32], index: 3, kind: input, shape index: {}]
  %s4 = inlined_call_operand.vmem [shape: f32[2,32,96], index: 4, kind: input, shape index: {}]
  %s5 = inlined_call_operand.vmem [shape: f32[2,1,96], index: 5, kind: input, shape index: {}]
  %s6 = inlined_call_operand.vmem [shape: f32[2,32,32], index: 6, kind: input, shape index: {}]
  %s7 = inlined_call_operand.vmem [shape: f32[2,1,32], index: 7, kind: input, shape index: {}]
  %s8 = inlined_call_operand.vmem [shape: f32[2,1,32], index: 8, kind: input, shape index: {}]
  %s9 = inlined_call_operand.vmem [shape: f32[2,1,32], index: 9, kind: input, shape index: {}]
  %s10 = inlined_call_operand.vmem [shape: f32[2,32,64], index: 10, kind: input, shape index: {}]
  %s11 = inlined_call_operand.vmem [shape: f32[2,1,64], index: 11, kind: input, shape index: {}]
  %s12 = inlined_call_operand.vmem [shape: f32[2,64,32], index: 12, kind: input, shape index: {}]
  %s13 = inlined_call_operand.vmem [shape: f32[2,1,32], index: 13, kind: input, shape index: {}]
  %s14 = inlined_call_operand.vmem [shape: f32[2,1,32], index: 14, kind: input, shape index: {}]
  %s15 = inlined_call_operand.vmem [shape: f32[2,1,32], index: 15, kind: input, shape index: {}]
  %s16 = inlined_call_operand.vmem [shape: f32[1,32], index: 16, kind: input, shape index: {}]
  %s17 = inlined_call_operand.vmem [shape: f32[1,32], index: 17, kind: input, shape index: {}]
  %s18 = inlined_call_operand.hbm [shape: f32[2,8,32], index: 18, kind: output, shape index: {}]
  %s19 = sld [smem:[#allocation0]]
  $region121: #{tpu_custom_call.1} parent=0
    _
  %s21 = ssub.s32 1, %s19
  %s22 = scalar_select 0, %s21, %s19
  $region1: #{tpu_custom_call.1} parent=0
    #allocation3 [shape = 'u8[8192]{0}', space=vmem, size = 0x2000, scoped, tag = 'input window, operand 0']
    #allocation4 [shape = 's32[2]{0}', space=sflag, size = 0x8, scoped, tag = 'scoped memory for tpu_custom_call.1']
    #allocation5 [shape = 's32[2]{0}', space=sflag, size = 0x8, scoped, tag = 'scoped memory for tpu_custom_call.1']
    #allocation6 [shape = 'u8[8192]{0}', space=vmem, size = 0x2000, scoped, tag = 'input window, operand 2, single buffered']
    #allocation7 [shape = 's32[1]{0}', space=sflag, size = 0x4, scoped, tag = 'scoped memory for tpu_custom_call.1']
    #allocation8 [shape = 'u8[8192]{0}', space=vmem, size = 0x2000, scoped, tag = 'output window, operand 0']
    %23 = vsyncpa [#allocation4], 0
    %s24 = scalar_lea.sflag [#allocation4], 1
    %25 = vsyncpa %s24, 0
    %26 = vsyncpa [#allocation7], 0
    %27 = vsyncpa [#allocation5], 0
    %s28 = scalar_lea.sflag [#allocation5], 1
    %29 = vsyncpa %s28, 0
    loop: start=0, step=1, limit=6
    $region2: #{tpu_custom_call.1} parent=1 // loop_pre_header
      _
    $region3: #{tpu_custom_call.1} parent=1 // loop_header
      %s31 = sphi 0, %s35
      %p32 = scmp.ge.s32.totalorder %s31, 6
      %s38 = sphi 0, %s50
      %s39 = sphi 0, %s46
      %s40 = sphi 0, %s38
      %s41 = sphi 0, %s39
      %s42 = sphi 0, %s40
      %s43 = sphi 0, %s41
      %s53 = sphi 0, %s55
      %s56 = sphi 0, %s53
      %s57 = sphi 0, %s56
      %s73 = sphi 0, %s57
      %s79 = sphi 0, %s81
      %s82 = sphi 0, %s79
      %s83 = sphi 0, %s82
      %s99 = sphi 0, %s83
      %s103 = sphi 0, %s103
      %s105 = sphi 0, %s103
      %s106 = sphi 0, %s105
      %s120 = sphi 0, %s106
      %s124 = sphi 0, %s124
      %s126 = sphi 0, %s124
      %s127 = sphi 0, %s126
      %s141 = sphi 0, %s127
      %s147 = sphi 0, %s149
      %s150 = sphi 0, %s147
      %s151 = sphi 0, %s150
      %s167 = sphi 0, %s151
      %s173 = sphi 0, %s175
      %s176 = sphi 0, %s173
      %s177 = sphi 0, %s176
      %s193 = sphi 0, %s177
      %s199 = sphi 0, %s201
      %s202 = sphi 0, %s199
      %s203 = sphi 0, %s202
      %s219 = sphi 0, %s203
      %s225 = sphi 0, %s227
      %s228 = sphi 0, %s225
      %s229 = sphi 0, %s228
      %s245 = sphi 0, %s229
      %s251 = sphi 0, %s253
      %s254 = sphi 0, %s251
      %s255 = sphi 0, %s254
      %s271 = sphi 0, %s255
      %s277 = sphi 0, %s279
      %s280 = sphi 0, %s277
      %s281 = sphi 0, %s280
      %s297 = sphi 0, %s281
      %s303 = sphi 0, %s305
      %s306 = sphi 0, %s303
      %s307 = sphi 0, %s306
      %s323 = sphi 0, %s307
      %s329 = sphi 0, %s331
      %s332 = sphi 0, %s329
      %s333 = sphi 0, %s332
      %s349 = sphi 0, %s333
      %s355 = sphi 0, %s357
      %s358 = sphi 0, %s355
      %s359 = sphi 0, %s358
      %s375 = sphi 0, %s359
      %s381 = sphi 0, %s383
      %s384 = sphi 0, %s381
      %s385 = sphi 0, %s384
      %s401 = sphi 0, %s385
      %s407 = sphi 0, %s409
      %s410 = sphi 0, %s407
      %s411 = sphi 0, %s410
      %s427 = sphi 0, %s411
      %s433 = sphi 0, %s435
      %s436 = sphi 0, %s433
      %s437 = sphi 0, %s436
      %s453 = sphi 0, %s437
      %s457 = sphi 0, %s457
      %s459 = sphi 0, %s457
      %s460 = sphi 0, %s459
      %s474 = sphi 0, %s460
      %s478 = sphi 0, %s478
      %s480 = sphi 0, %s478
      %s481 = sphi 0, %s480
      %s495 = sphi 0, %s481
      %s501 = sphi 0, %s503
      %s504 = sphi 0, %s501
      %s505 = sphi 0, %s504
      %s521 = sphi 0, %s505
    $region4: #{tpu_custom_call.1} parent=1 // loop_header_branch
      %34 = sbr.rel (%p32) target = $region8
    $region5: #{tpu_custom_call.1} parent=1 // loop_body
      %s36 = ssub.s32 %s31, 1
      %s37 = ssub.s32 %s31, 2
      %s44 = sadd.s32 1, %s39
      %p45 = scmp.ge.s32.totalorder %s44, 2
      %s46 = scalar_select %p45, 0, %s44
      %s47 = sadd.s32 1, %s38
      %s48 = scalar_select %p45, %s47, %s38
      %p49 = scmp.ge.s32.totalorder %s48, 2
      %s50 = scalar_select %p49, 0, %s48
      %s51 = ssub.s32 %s38, %s50
      %p52 = scmp.eq.s32.totalorder %s51, 0
      %s54 = sadd.s32 %s53, 1
      %s55 = scalar_select %p52, %s53, %s54
      %p58 = pneg %p52
      %p59 = scmp.eq.s32.totalorder %s31, 3
      %p60 = por %p58, %p59
      %p61 = scmp.ne.s32.totalorder %s53, %s56
      %p62 = scmp.eq.s32.totalorder %s31, 0
      %p63 = por %p61, %p62
      %p64 = scmp.ne.s32.totalorder %s53, %s56
      %p65 = scmp.eq.s32.totalorder %s36, 3
      %p66 = por %p64, %p65
      %p67 = scmp.ne.s32.totalorder %s56, %s57
      %p68 = scmp.eq.s32.totalorder %s36, 0
      %p69 = por %p67, %p68
      %p70 = scmp.ne.s32.totalorder %s56, %s57
      %p71 = scmp.eq.s32.totalorder %s37, 3
      %p72 = por %p70, %p71
      %p74 = scmp.ne.s32.totalorder %s57, %s73
      %p75 = scmp.eq.s32.totalorder %s37, 0
      %p76 = por %p74, %p75
      %s77 = ssub.s32 %s38, %s50
      %p78 = scmp.eq.s32.totalorder %s77, 0
      %s80 = sadd.s32 %s79, 1
      %s81 = scalar_select %p78, %s79, %s80
      %p84 = pneg %p78
      %p85 = scmp.eq.s32.totalorder %s31, 3
      %p86 = por %p84, %p85
      %p87 = scmp.ne.s32.totalorder %s79, %s82
      %p88 = scmp.eq.s32.totalorder %s31, 0
      %p89 = por %p87, %p88
      %p90 = scmp.ne.s32.totalorder %s79, %s82
      %p91 = scmp.eq.s32.totalorder %s36, 3
      %p92 = por %p90, %p91
      %p93 = scmp.ne.s32.totalorder %s82, %s83
      %p94 = scmp.eq.s32.totalorder %s36, 0
      %p95 = por %p93, %p94
      %p96 = scmp.ne.s32.totalorder %s82, %s83
      %p97 = scmp.eq.s32.totalorder %s37, 3
      %p98 = por %p96, %p97
      %p100 = scmp.ne.s32.totalorder %s83, %s99
      %p101 = scmp.eq.s32.totalorder %s37, 0
      %p102 = por %p100, %p101
      %s104 = sadd.s32 %s103, 1
      %p107 = scmp.eq.s32.totalorder %s31, 3
      %p108 = scmp.ne.s32.totalorder %s103, %s105
      %p109 = scmp.eq.s32.totalorder %s31, 0
      %p110 = por %p108, %p109
      %p111 = scmp.ne.s32.totalorder %s103, %s105
      %p112 = scmp.eq.s32.totalorder %s36, 3
      %p113 = por %p111, %p112
      %p114 = scmp.ne.s32.totalorder %s105, %s106
      %p115 = scmp.eq.s32.totalorder %s36, 0
      %p116 = por %p114, %p115
      %p117 = scmp.ne.s32.totalorder %s105, %s106
      %p118 = scmp.eq.s32.totalorder %s37, 3
      %p119 = por %p117, %p118
      %p121 = scmp.ne.s32.totalorder %s106, %s120
      %p122 = scmp.eq.s32.totalorder %s37, 0
      %p123 = por %p121, %p122
      %s125 = sadd.s32 %s124, 1
      %p128 = scmp.eq.s32.totalorder %s31, 3
      %p129 = scmp.ne.s32.totalorder %s124, %s126
      %p130 = scmp.eq.s32.totalorder %s31, 0
      %p131 = por %p129, %p130
      %p132 = scmp.ne.s32.totalorder %s124, %s126
      %p133 = scmp.eq.s32.totalorder %s36, 3
      %p134 = por %p132, %p133
      %p135 = scmp.ne.s32.totalorder %s126, %s127
      %p136 = scmp.eq.s32.totalorder %s36, 0
      %p137 = por %p135, %p136
      %p138 = scmp.ne.s32.totalorder %s126, %s127
      %p139 = scmp.eq.s32.totalorder %s37, 3
      %p140 = por %p138, %p139
      %p142 = scmp.ne.s32.totalorder %s127, %s141
      %p143 = scmp.eq.s32.totalorder %s37, 0
      %p144 = por %p142, %p143
      %s145 = ssub.s32 %s39, %s46
      %p146 = scmp.eq.s32.totalorder %s145, 0
      %s148 = sadd.s32 %s147, 1
      %s149 = scalar_select %p146, %s147, %s148
      %p152 = pneg %p146
      %p153 = scmp.eq.s32.totalorder %s31, 3
      %p154 = por %p152, %p153
      %p155 = scmp.ne.s32.totalorder %s147, %s150
      %p156 = scmp.eq.s32.totalorder %s31, 0
      %p157 = por %p155, %p156
      %p158 = scmp.ne.s32.totalorder %s147, %s150
      %p159 = scmp.eq.s32.totalorder %s36, 3
      %p160 = por %p158, %p159
      %p161 = scmp.ne.s32.totalorder %s150, %s151
      %p162 = scmp.eq.s32.totalorder %s36, 0
      %p163 = por %p161, %p162
      %p164 = scmp.ne.s32.totalorder %s150, %s151
      %p165 = scmp.eq.s32.totalorder %s37, 3
      %p166 = por %p164, %p165
      %p168 = scmp.ne.s32.totalorder %s151, %s167
      %p169 = scmp.eq.s32.totalorder %s37, 0
      %p170 = por %p168, %p169
      %s171 = ssub.s32 %s39, %s46
      %p172 = scmp.eq.s32.totalorder %s171, 0
      %s174 = sadd.s32 %s173, 1
      %s175 = scalar_select %p172, %s173, %s174
      %p178 = pneg %p172
      %p179 = scmp.eq.s32.totalorder %s31, 3
      %p180 = por %p178, %p179
      %p181 = scmp.ne.s32.totalorder %s173, %s176
      %p182 = scmp.eq.s32.totalorder %s31, 0
      %p183 = por %p181, %p182
      %p184 = scmp.ne.s32.totalorder %s173, %s176
      %p185 = scmp.eq.s32.totalorder %s36, 3
      %p186 = por %p184, %p185
      %p187 = scmp.ne.s32.totalorder %s176, %s177
      %p188 = scmp.eq.s32.totalorder %s36, 0
      %p189 = por %p187, %p188
      %p190 = scmp.ne.s32.totalorder %s176, %s177
      %p191 = scmp.eq.s32.totalorder %s37, 3
      %p192 = por %p190, %p191
      %p194 = scmp.ne.s32.totalorder %s177, %s193
      %p195 = scmp.eq.s32.totalorder %s37, 0
      %p196 = por %p194, %p195
      %s197 = ssub.s32 %s39, %s46
      %p198 = scmp.eq.s32.totalorder %s197, 0
      %s200 = sadd.s32 %s199, 1
      %s201 = scalar_select %p198, %s199, %s200
      %p204 = pneg %p198
      %p205 = scmp.eq.s32.totalorder %s31, 3
      %p206 = por %p204, %p205
      %p207 = scmp.ne.s32.totalorder %s199, %s202
      %p208 = scmp.eq.s32.totalorder %s31, 0
      %p209 = por %p207, %p208
      %p210 = scmp.ne.s32.totalorder %s199, %s202
      %p211 = scmp.eq.s32.totalorder %s36, 3
      %p212 = por %p210, %p211
      %p213 = scmp.ne.s32.totalorder %s202, %s203
      %p214 = scmp.eq.s32.totalorder %s36, 0
      %p215 = por %p213, %p214
      %p216 = scmp.ne.s32.totalorder %s202, %s203
      %p217 = scmp.eq.s32.totalorder %s37, 3
      %p218 = por %p216, %p217
      %p220 = scmp.ne.s32.totalorder %s203, %s219
      %p221 = scmp.eq.s32.totalorder %s37, 0
      %p222 = por %p220, %p221
      %s223 = ssub.s32 %s39, %s46
      %p224 = scmp.eq.s32.totalorder %s223, 0
      %s226 = sadd.s32 %s225, 1
      %s227 = scalar_select %p224, %s225, %s226
      %p230 = pneg %p224
      %p231 = scmp.eq.s32.totalorder %s31, 3
      %p232 = por %p230, %p231
      %p233 = scmp.ne.s32.totalorder %s225, %s228
      %p234 = scmp.eq.s32.totalorder %s31, 0
      %p235 = por %p233, %p234
      %p236 = scmp.ne.s32.totalorder %s225, %s228
      %p237 = scmp.eq.s32.totalorder %s36, 3
      %p238 = por %p236, %p237
      %p239 = scmp.ne.s32.totalorder %s228, %s229
      %p240 = scmp.eq.s32.totalorder %s36, 0
      %p241 = por %p239, %p240
      %p242 = scmp.ne.s32.totalorder %s228, %s229
      %p243 = scmp.eq.s32.totalorder %s37, 3
      %p244 = por %p242, %p243
      %p246 = scmp.ne.s32.totalorder %s229, %s245
      %p247 = scmp.eq.s32.totalorder %s37, 0
      %p248 = por %p246, %p247
      %s249 = ssub.s32 %s39, %s46
      %p250 = scmp.eq.s32.totalorder %s249, 0
      %s252 = sadd.s32 %s251, 1
      %s253 = scalar_select %p250, %s251, %s252
      %p256 = pneg %p250
      %p257 = scmp.eq.s32.totalorder %s31, 3
      %p258 = por %p256, %p257
      %p259 = scmp.ne.s32.totalorder %s251, %s254
      %p260 = scmp.eq.s32.totalorder %s31, 0
      %p261 = por %p259, %p260
      %p262 = scmp.ne.s32.totalorder %s251, %s254
      %p263 = scmp.eq.s32.totalorder %s36, 3
      %p264 = por %p262, %p263
      %p265 = scmp.ne.s32.totalorder %s254, %s255
      %p266 = scmp.eq.s32.totalorder %s36, 0
      %p267 = por %p265, %p266
      %p268 = scmp.ne.s32.totalorder %s254, %s255
      %p269 = scmp.eq.s32.totalorder %s37, 3
      %p270 = por %p268, %p269
      %p272 = scmp.ne.s32.totalorder %s255, %s271
      %p273 = scmp.eq.s32.totalorder %s37, 0
      %p274 = por %p272, %p273
      %s275 = ssub.s32 %s39, %s46
      %p276 = scmp.eq.s32.totalorder %s275, 0
      %s278 = sadd.s32 %s277, 1
      %s279 = scalar_select %p276, %s277, %s278
      %p282 = pneg %p276
      %p283 = scmp.eq.s32.totalorder %s31, 3
      %p284 = por %p282, %p283
      %p285 = scmp.ne.s32.totalorder %s277, %s280
      %p286 = scmp.eq.s32.totalorder %s31, 0
      %p287 = por %p285, %p286
      %p288 = scmp.ne.s32.totalorder %s277, %s280
      %p289 = scmp.eq.s32.totalorder %s36, 3
      %p290 = por %p288, %p289
      %p291 = scmp.ne.s32.totalorder %s280, %s281
      %p292 = scmp.eq.s32.totalorder %s36, 0
      %p293 = por %p291, %p292
      %p294 = scmp.ne.s32.totalorder %s280, %s281
      %p295 = scmp.eq.s32.totalorder %s37, 3
      %p296 = por %p294, %p295
      %p298 = scmp.ne.s32.totalorder %s281, %s297
      %p299 = scmp.eq.s32.totalorder %s37, 0
      %p300 = por %p298, %p299
      %s301 = ssub.s32 %s39, %s46
      %p302 = scmp.eq.s32.totalorder %s301, 0
      %s304 = sadd.s32 %s303, 1
      %s305 = scalar_select %p302, %s303, %s304
      %p308 = pneg %p302
      %p309 = scmp.eq.s32.totalorder %s31, 3
      %p310 = por %p308, %p309
      %p311 = scmp.ne.s32.totalorder %s303, %s306
      %p312 = scmp.eq.s32.totalorder %s31, 0
      %p313 = por %p311, %p312
      %p314 = scmp.ne.s32.totalorder %s303, %s306
      %p315 = scmp.eq.s32.totalorder %s36, 3
      %p316 = por %p314, %p315
      %p317 = scmp.ne.s32.totalorder %s306, %s307
      %p318 = scmp.eq.s32.totalorder %s36, 0
      %p319 = por %p317, %p318
      %p320 = scmp.ne.s32.totalorder %s306, %s307
      %p321 = scmp.eq.s32.totalorder %s37, 3
      %p322 = por %p320, %p321
      %p324 = scmp.ne.s32.totalorder %s307, %s323
      %p325 = scmp.eq.s32.totalorder %s37, 0
      %p326 = por %p324, %p325
      %s327 = ssub.s32 %s39, %s46
      %p328 = scmp.eq.s32.totalorder %s327, 0
      %s330 = sadd.s32 %s329, 1
      %s331 = scalar_select %p328, %s329, %s330
      %p334 = pneg %p328
      %p335 = scmp.eq.s32.totalorder %s31, 3
      %p336 = por %p334, %p335
      %p337 = scmp.ne.s32.totalorder %s329, %s332
      %p338 = scmp.eq.s32.totalorder %s31, 0
      %p339 = por %p337, %p338
      %p340 = scmp.ne.s32.totalorder %s329, %s332
      %p341 = scmp.eq.s32.totalorder %s36, 3
      %p342 = por %p340, %p341
      %p343 = scmp.ne.s32.totalorder %s332, %s333
      %p344 = scmp.eq.s32.totalorder %s36, 0
      %p345 = por %p343, %p344
      %p346 = scmp.ne.s32.totalorder %s332, %s333
      %p347 = scmp.eq.s32.totalorder %s37, 3
      %p348 = por %p346, %p347
      %p350 = scmp.ne.s32.totalorder %s333, %s349
      %p351 = scmp.eq.s32.totalorder %s37, 0
      %p352 = por %p350, %p351
      %s353 = ssub.s32 %s39, %s46
      %p354 = scmp.eq.s32.totalorder %s353, 0
      %s356 = sadd.s32 %s355, 1
      %s357 = scalar_select %p354, %s355, %s356
      %p360 = pneg %p354
      %p361 = scmp.eq.s32.totalorder %s31, 3
      %p362 = por %p360, %p361
      %p363 = scmp.ne.s32.totalorder %s355, %s358
      %p364 = scmp.eq.s32.totalorder %s31, 0
      %p365 = por %p363, %p364
      %p366 = scmp.ne.s32.totalorder %s355, %s358
      %p367 = scmp.eq.s32.totalorder %s36, 3
      %p368 = por %p366, %p367
      %p369 = scmp.ne.s32.totalorder %s358, %s359
      %p370 = scmp.eq.s32.totalorder %s36, 0
      %p371 = por %p369, %p370
      %p372 = scmp.ne.s32.totalorder %s358, %s359
      %p373 = scmp.eq.s32.totalorder %s37, 3
      %p374 = por %p372, %p373
      %p376 = scmp.ne.s32.totalorder %s359, %s375
      %p377 = scmp.eq.s32.totalorder %s37, 0
      %p378 = por %p376, %p377
      %s379 = ssub.s32 %s39, %s46
      %p380 = scmp.eq.s32.totalorder %s379, 0
      %s382 = sadd.s32 %s381, 1
      %s383 = scalar_select %p380, %s381, %s382
      %p386 = pneg %p380
      %p387 = scmp.eq.s32.totalorder %s31, 3
      %p388 = por %p386, %p387
      %p389 = scmp.ne.s32.totalorder %s381, %s384
      %p390 = scmp.eq.s32.totalorder %s31, 0
      %p391 = por %p389, %p390
      %p392 = scmp.ne.s32.totalorder %s381, %s384
      %p393 = scmp.eq.s32.totalorder %s36, 3
      %p394 = por %p392, %p393
      %p395 = scmp.ne.s32.totalorder %s384, %s385
      %p396 = scmp.eq.s32.totalorder %s36, 0
      %p397 = por %p395, %p396
      %p398 = scmp.ne.s32.totalorder %s384, %s385
      %p399 = scmp.eq.s32.totalorder %s37, 3
      %p400 = por %p398, %p399
      %p402 = scmp.ne.s32.totalorder %s385, %s401
      %p403 = scmp.eq.s32.totalorder %s37, 0
      %p404 = por %p402, %p403
      %s405 = ssub.s32 %s39, %s46
      %p406 = scmp.eq.s32.totalorder %s405, 0
      %s408 = sadd.s32 %s407, 1
      %s409 = scalar_select %p406, %s407, %s408
      %p412 = pneg %p406
      %p413 = scmp.eq.s32.totalorder %s31, 3
      %p414 = por %p412, %p413
      %p415 = scmp.ne.s32.totalorder %s407, %s410
      %p416 = scmp.eq.s32.totalorder %s31, 0
      %p417 = por %p415, %p416
      %p418 = scmp.ne.s32.totalorder %s407, %s410
      %p419 = scmp.eq.s32.totalorder %s36, 3
      %p420 = por %p418, %p419
      %p421 = scmp.ne.s32.totalorder %s410, %s411
      %p422 = scmp.eq.s32.totalorder %s36, 0
      %p423 = por %p421, %p422
      %p424 = scmp.ne.s32.totalorder %s410, %s411
      %p425 = scmp.eq.s32.totalorder %s37, 3
      %p426 = por %p424, %p425
      %p428 = scmp.ne.s32.totalorder %s411, %s427
      %p429 = scmp.eq.s32.totalorder %s37, 0
      %p430 = por %p428, %p429
      %s431 = ssub.s32 %s39, %s46
      %p432 = scmp.eq.s32.totalorder %s431, 0
      %s434 = sadd.s32 %s433, 1
      %s435 = scalar_select %p432, %s433, %s434
      %p438 = pneg %p432
      %p439 = scmp.eq.s32.totalorder %s31, 3
      %p440 = por %p438, %p439
      %p441 = scmp.ne.s32.totalorder %s433, %s436
      %p442 = scmp.eq.s32.totalorder %s31, 0
      %p443 = por %p441, %p442
      %p444 = scmp.ne.s32.totalorder %s433, %s436
      %p445 = scmp.eq.s32.totalorder %s36, 3
      %p446 = por %p444, %p445
      %p447 = scmp.ne.s32.totalorder %s436, %s437
      %p448 = scmp.eq.s32.totalorder %s36, 0
      %p449 = por %p447, %p448
      %p450 = scmp.ne.s32.totalorder %s436, %s437
      %p451 = scmp.eq.s32.totalorder %s37, 3
      %p452 = por %p450, %p451
      %p454 = scmp.ne.s32.totalorder %s437, %s453
      %p455 = scmp.eq.s32.totalorder %s37, 0
      %p456 = por %p454, %p455
      %s458 = sadd.s32 %s457, 1
      %p461 = scmp.eq.s32.totalorder %s31, 3
      %p462 = scmp.ne.s32.totalorder %s457, %s459
      %p463 = scmp.eq.s32.totalorder %s31, 0
      %p464 = por %p462, %p463
      %p465 = scmp.ne.s32.totalorder %s457, %s459
      %p466 = scmp.eq.s32.totalorder %s36, 3
      %p467 = por %p465, %p466
      %p468 = scmp.ne.s32.totalorder %s459, %s460
      %p469 = scmp.eq.s32.totalorder %s36, 0
      %p470 = por %p468, %p469
      %p471 = scmp.ne.s32.totalorder %s459, %s460
      %p472 = scmp.eq.s32.totalorder %s37, 3
      %p473 = por %p471, %p472
      %p475 = scmp.ne.s32.totalorder %s460, %s474
      %p476 = scmp.eq.s32.totalorder %s37, 0
      %p477 = por %p475, %p476
      %s479 = sadd.s32 %s478, 1
      %p482 = scmp.eq.s32.totalorder %s31, 3
      %p483 = scmp.ne.s32.totalorder %s478, %s480
      %p484 = scmp.eq.s32.totalorder %s31, 0
      %p485 = por %p483, %p484
      %p486 = scmp.ne.s32.totalorder %s478, %s480
      %p487 = scmp.eq.s32.totalorder %s36, 3
      %p488 = por %p486, %p487
      %p489 = scmp.ne.s32.totalorder %s480, %s481
      %p490 = scmp.eq.s32.totalorder %s36, 0
      %p491 = por %p489, %p490
      %p492 = scmp.ne.s32.totalorder %s480, %s481
      %p493 = scmp.eq.s32.totalorder %s37, 3
      %p494 = por %p492, %p493
      %p496 = scmp.ne.s32.totalorder %s481, %s495
      %p497 = scmp.eq.s32.totalorder %s37, 0
      %p498 = por %p496, %p497
      %s499 = ssub.s32 %s38, %s50
      %p500 = scmp.eq.s32.totalorder %s499, 0
      %s502 = sadd.s32 %s501, 1
      %s503 = scalar_select %p500, %s501, %s502
      %p506 = pneg %p500
      %p507 = scmp.eq.s32.totalorder %s31, 3
      %p508 = por %p506, %p507
      %p509 = scmp.ne.s32.totalorder %s501, %s504
      %p510 = scmp.eq.s32.totalorder %s31, 0
      %p511 = por %p509, %p510
      %p512 = scmp.ne.s32.totalorder %s501, %s504
      %p513 = scmp.eq.s32.totalorder %s36, 3
      %p514 = por %p512, %p513
      %p515 = scmp.ne.s32.totalorder %s504, %s505
      %p516 = scmp.eq.s32.totalorder %s36, 0
      %p517 = por %p515, %p516
      %p518 = scmp.ne.s32.totalorder %s504, %s505
      %p519 = scmp.eq.s32.totalorder %s37, 3
      %p520 = por %p518, %p519
      %p522 = scmp.ne.s32.totalorder %s505, %s521
      %p523 = scmp.eq.s32.totalorder %s37, 0
      %p524 = por %p522, %p523
      %p525 = scmp.le.s32.totalorder 1, %s31
      %p526 = scmp.lt.s32.totalorder %s31, 5
      %p527 = pnand %p525, %p526
      %p528 = pneg %p527
      // Predicated region
      $region9: #{tpu_custom_call.1} parent=5 // pred_check
        _
      $region10: #{tpu_custom_call.1} parent=5 // pred_check_branch
        %530 = sbr.rel (%p527) target = $region12
      $region11: #{tpu_custom_call.1} parent=5 // pred_region
        %s531 = ssub.s32 %s31, 1
        // Predicated region
        $region13: #{tpu_custom_call.1} parent=11 // pred_check
          %p532 = pneg %p116
        $region14: #{tpu_custom_call.1} parent=11 // pred_check_branch
          %534 = sbr.rel (%p532) target = $region16
        $region15: #{tpu_custom_call.1} parent=11 // pred_region
          %s536 = ssub.s32 256, 256
          %537 = vsyncadd [#allocation7], %s536
          %s538 = sshll.u32 [#allocation6], 4
          %s539 = int_to_ptr.vmem [resolvable:$true] %s538
          %544 = dma.hbm_to_vmem [thread:$0]  %s2, 256, %s539, [#allocation7], 128, 128, 8
        $region16: #{tpu_custom_call.1} parent=11 // pred_fallthru
          _
        // Predicated region
        $region17: #{tpu_custom_call.1} parent=11 // pred_check
          %p545 = pneg %p137
        $region18: #{tpu_custom_call.1} parent=11 // pred_check_branch
          %547 = sbr.rel (%p545) target = $region20
        $region19: #{tpu_custom_call.1} parent=11 // pred_region
          _
        $region20: #{tpu_custom_call.1} parent=11 // pred_fallthru
          _
        // Predicated region
        $region21: #{tpu_custom_call.1} parent=11 // pred_check
          %p548 = pneg %p470
        $region22: #{tpu_custom_call.1} parent=11 // pred_check_branch
          %550 = sbr.rel (%p548) target = $region24
        $region23: #{tpu_custom_call.1} parent=11 // pred_region
          _
        $region24: #{tpu_custom_call.1} parent=11 // pred_fallthru
          _
        // Predicated region
        $region25: #{tpu_custom_call.1} parent=11 // pred_check
          %p551 = pneg %p491
        $region26: #{tpu_custom_call.1} parent=11 // pred_check_branch
          %553 = sbr.rel (%p551) target = $region28
        $region27: #{tpu_custom_call.1} parent=11 // pred_region
          _
        $region28: #{tpu_custom_call.1} parent=11 // pred_fallthru
          _
      $region12: #{tpu_custom_call.1} parent=5 // pred_fallthru
        _
      %p554 = scmp.lt.s32.totalorder %s31, 4
      // Predicated region
      $region29: #{tpu_custom_call.1} parent=5 // pred_check
        %p555 = pneg %p554
      $region30: #{tpu_custom_call.1} parent=5 // pred_check_branch
        %557 = sbr.rel (%p555) target = $region32
      $region31: #{tpu_custom_call.1} parent=5 // pred_region
        // Predicated region
        $region33: #{tpu_custom_call.1} parent=31 // pred_check
          %p558 = pneg %p63
        $region34: #{tpu_custom_call.1} parent=31 // pred_check_branch
          %560 = sbr.rel (%p558) target = $region36
        $region35: #{tpu_custom_call.1} parent=31 // pred_region
          %s561 = sand.u32 %s53, 1
          %s562 = scalar_lea.sflag [#allocation4], %s561
          %s563 = sand.u32 %s53, 1
          %s564 = smul.addr %s563, 8
          %s565 = scalar_lea.vmem [#allocation3], %s564
          %s567 = ssub.s32 128, 128
          %568 = vsyncadd %s562, %s567
          %s569 = smul.addr %s38, 128
          %s570 = scalar_lea.hbm %s0, %s569
          %s572 = sshll.u32 %s565, 4
          %s573 = int_to_ptr.vmem [resolvable:$true] %s572
          %575 = dma.hbm_to_vmem [thread:$0]  %s570, 128, %s573, %s562
        $region36: #{tpu_custom_call.1} parent=31 // pred_fallthru
          _
        // Predicated region
        $region37: #{tpu_custom_call.1} parent=31 // pred_check
          %p576 = pneg %p89
        $region38: #{tpu_custom_call.1} parent=31 // pred_check_branch
          %578 = sbr.rel (%p576) target = $region40
        $region39: #{tpu_custom_call.1} parent=31 // pred_region
          %p579 = scmp.lt.s32.totalorder %s38, 1
          %s580 = scalar_select %p579, %s38, 1
          %s581 = scalar_lea.vmem %s1, %s580
        $region40: #{tpu_custom_call.1} parent=31 // pred_fallthru
          _
        // Predicated region
        $region41: #{tpu_custom_call.1} parent=31 // pred_check
          %p582 = pneg %p157
        $region42: #{tpu_custom_call.1} parent=31 // pred_check_branch
          %584 = sbr.rel (%p582) target = $region44
        $region43: #{tpu_custom_call.1} parent=31 // pred_region
          %p585 = scmp.lt.s32.totalorder %s39, 1
          %s586 = scalar_select %p585, %s39, 1
          %s587 = smul.addr %s586, 4
          %s588 = smul.addr %s587, 8
          %s589 = scalar_lea.vmem %s4, %s588
        $region44: #{tpu_custom_call.1} parent=31 // pred_fallthru
          _
        // Predicated region
        $region45: #{tpu_custom_call.1} parent=31 // pred_check
          %p590 = pneg %p183
        $region46: #{tpu_custom_call.1} parent=31 // pred_check_branch
          %592 = sbr.rel (%p590) target = $region48
        $region47: #{tpu_custom_call.1} parent=31 // pred_region
          %p593 = scmp.lt.s32.totalorder %s39, 1
          %s594 = scalar_select %p593, %s39, 1
          %s595 = scalar_lea.vmem %s5, %s594
        $region48: #{tpu_custom_call.1} parent=31 // pred_fallthru
          _
        // Predicated region
        $region49: #{tpu_custom_call.1} parent=31 // pred_check
          %p596 = pneg %p209
        $region50: #{tpu_custom_call.1} parent=31 // pred_check_branch
          %598 = sbr.rel (%p596) target = $region52
        $region51: #{tpu_custom_call.1} parent=31 // pred_region
          %p599 = scmp.lt.s32.totalorder %s39, 1
          %s600 = scalar_select %p599, %s39, 1
          %s601 = smul.addr %s600, 4
          %s602 = smul.addr %s601, 8
          %s603 = scalar_lea.vmem %s6, %s602
        $region52: #{tpu_custom_call.1} parent=31 // pred_fallthru
          _
        // Predicated region
        $region53: #{tpu_custom_call.1} parent=31 // pred_check
          %p604 = pneg %p235
        $region54: #{tpu_custom_call.1} parent=31 // pred_check_branch
          %606 = sbr.rel (%p604) target = $region56
        $region55: #{tpu_custom_call.1} parent=31 // pred_region
          %p607 = scmp.lt.s32.totalorder %s39, 1
          %s608 = scalar_select %p607, %s39, 1
          %s609 = scalar_lea.vmem %s7, %s608
        $region56: #{tpu_custom_call.1} parent=31 // pred_fallthru
          _
        // Predicated region
        $region57: #{tpu_custom_call.1} parent=31 // pred_check
          %p610 = pneg %p261
        $region58: #{tpu_custom_call.1} parent=31 // pred_check_branch
          %612 = sbr.rel (%p610) target = $region60
        $region59: #{tpu_custom_call.1} parent=31 // pred_region
          %p613 = scmp.lt.s32.totalorder %s39, 1
          %s614 = scalar_select %p613, %s39, 1
          %s615 = scalar_lea.vmem %s8, %s614
        $region60: #{tpu_custom_call.1} parent=31 // pred_fallthru
          _
        // Predicated region
        $region61: #{tpu_custom_call.1} parent=31 // pred_check
          %p616 = pneg %p287
        $region62: #{tpu_custom_call.1} parent=31 // pred_check_branch
          %618 = sbr.rel (%p616) target = $region64
        $region63: #{tpu_custom_call.1} parent=31 // pred_region
          %p619 = scmp.lt.s32.totalorder %s39, 1
          %s620 = scalar_select %p619, %s39, 1
          %s621 = scalar_lea.vmem %s9, %s620
        $region64: #{tpu_custom_call.1} parent=31 // pred_fallthru
          _
        // Predicated region
        $region65: #{tpu_custom_call.1} parent=31 // pred_check
          %p622 = pneg %p313
        $region66: #{tpu_custom_call.1} parent=31 // pred_check_branch
          %624 = sbr.rel (%p622) target = $region68
        $region67: #{tpu_custom_call.1} parent=31 // pred_region
          %p625 = scmp.lt.s32.totalorder %s39, 1
          %s626 = scalar_select %p625, %s39, 1
          %s627 = smul.addr %s626, 4
          %s628 = smul.addr %s627, 8
          %s629 = scalar_lea.vmem %s10, %s628
        $region68: #{tpu_custom_call.1} parent=31 // pred_fallthru
          _
        // Predicated region
        $region69: #{tpu_custom_call.1} parent=31 // pred_check
          %p630 = pneg %p339
        $region70: #{tpu_custom_call.1} parent=31 // pred_check_branch
          %632 = sbr.rel (%p630) target = $region72
        $region71: #{tpu_custom_call.1} parent=31 // pred_region
          %p633 = scmp.lt.s32.totalorder %s39, 1
          %s634 = scalar_select %p633, %s39, 1
          %s635 = scalar_lea.vmem %s11, %s634
        $region72: #{tpu_custom_call.1} parent=31 // pred_fallthru
          _
        // Predicated region
        $region73: #{tpu_custom_call.1} parent=31 // pred_check
          %p636 = pneg %p365
        $region74: #{tpu_custom_call.1} parent=31 // pred_check_branch
          %638 = sbr.rel (%p636) target = $region76
        $region75: #{tpu_custom_call.1} parent=31 // pred_region
          %p639 = scmp.lt.s32.totalorder %s39, 1
          %s640 = scalar_select %p639, %s39, 1
          %s641 = smul.addr %s640, 8
          %s642 = smul.addr %s641, 8
          %s643 = scalar_lea.vmem %s12, %s642
        $region76: #{tpu_custom_call.1} parent=31 // pred_fallthru
          _
        // Predicated region
        $region77: #{tpu_custom_call.1} parent=31 // pred_check
          %p644 = pneg %p391
        $region78: #{tpu_custom_call.1} parent=31 // pred_check_branch
          %646 = sbr.rel (%p644) target = $region80
        $region79: #{tpu_custom_call.1} parent=31 // pred_region
          %p647 = scmp.lt.s32.totalorder %s39, 1
          %s648 = scalar_select %p647, %s39, 1
          %s649 = scalar_lea.vmem %s13, %s648
        $region80: #{tpu_custom_call.1} parent=31 // pred_fallthru
          _
        // Predicated region
        $region81: #{tpu_custom_call.1} parent=31 // pred_check
          %p650 = pneg %p417
        $region82: #{tpu_custom_call.1} parent=31 // pred_check_branch
          %652 = sbr.rel (%p650) target = $region84
        $region83: #{tpu_custom_call.1} parent=31 // pred_region
          %p653 = scmp.lt.s32.totalorder %s39, 1
          %s654 = scalar_select %p653, %s39, 1
          %s655 = scalar_lea.vmem %s14, %s654
        $region84: #{tpu_custom_call.1} parent=31 // pred_fallthru
          _
        // Predicated region
        $region85: #{tpu_custom_call.1} parent=31 // pred_check
          %p656 = pneg %p443
        $region86: #{tpu_custom_call.1} parent=31 // pred_check_branch
          %658 = sbr.rel (%p656) target = $region88
        $region87: #{tpu_custom_call.1} parent=31 // pred_region
          %p659 = scmp.lt.s32.totalorder %s39, 1
          %s660 = scalar_select %p659, %s39, 1
          %s661 = scalar_lea.vmem %s15, %s660
        $region88: #{tpu_custom_call.1} parent=31 // pred_fallthru
          _
      $region32: #{tpu_custom_call.1} parent=5 // pred_fallthru
        _
      %p662 = scmp.le.s32.totalorder 1, %s31
      %p663 = scmp.lt.s32.totalorder %s31, 5
      %p664 = pnand %p662, %p663
      %p665 = pneg %p664
      // Predicated region
      $region89: #{tpu_custom_call.1} parent=5 // pred_check
        _
      $region90: #{tpu_custom_call.1} parent=5 // pred_check_branch
        %667 = sbr.rel (%p664) target = $region92
      $region91: #{tpu_custom_call.1} parent=5 // pred_region
        %s668 = ssub.s32 %s31, 1
        %s669 = sand.u32 %s56, 1
        %s670 = scalar_lea.sflag [#allocation4], %s669
        %s671 = sand.u32 %s56, 1
        %s672 = smul.addr %s671, 8
        %s673 = scalar_lea.vmem [#allocation3], %s672
        // Predicated region
        $region93: #{tpu_custom_call.1} parent=91 // pred_check
          %p674 = pneg %p69
        $region94: #{tpu_custom_call.1} parent=91 // pred_check_branch
          %676 = sbr.rel (%p674) target = $region96
        $region95: #{tpu_custom_call.1} parent=91 // pred_region
          %677 = dma.done %s670, 128
        $region96: #{tpu_custom_call.1} parent=91 // pred_fallthru
          _
        // Predicated region
        $region97: #{tpu_custom_call.1} parent=91 // pred_check
          %p678 = pneg %p116
        $region98: #{tpu_custom_call.1} parent=91 // pred_check_branch
          %680 = sbr.rel (%p678) target = $region100
        $region99: #{tpu_custom_call.1} parent=91 // pred_region
          %681 = dma.done [#allocation7], 256
        $region100: #{tpu_custom_call.1} parent=91 // pred_fallthru
          _
        %s682 = sand.u32 %s56, 1
        %s683 = scalar_lea.sflag [#allocation4], %s682
        %s684 = sand.u32 %s56, 1
        %s685 = smul.addr %s684, 8
        %s686 = scalar_lea.vmem [#allocation3], %s685
        %p687 = pneg %p69
        %p688 = pneg %p66
        %p689 = scmp.lt.s32.totalorder %s40, 1
        %s690 = scalar_select %p689, %s40, 1
        %s691 = scalar_lea.vmem %s1, %s690
        %p692 = pneg %p95
        %p693 = pneg %p92
        %p694 = pneg %p116
        %p695 = pneg %p113
        %p696 = pneg %p137
        %p697 = pneg %p134
        %p698 = scmp.lt.s32.totalorder %s41, 1
        %s699 = scalar_select %p698, %s41, 1
        %s700 = smul.addr %s699, 4
        %s701 = smul.addr %s700, 8
        %s702 = scalar_lea.vmem %s4, %s701
        %p703 = pneg %p163
        %p704 = pneg %p160
        %p705 = scmp.lt.s32.totalorder %s41, 1
        %s706 = scalar_select %p705, %s41, 1
        %s707 = scalar_lea.vmem %s5, %s706
        %p708 = pneg %p189
        %p709 = pneg %p186
        %p710 = scmp.lt.s32.totalorder %s41, 1
        %s711 = scalar_select %p710, %s41, 1
        %s712 = smul.addr %s711, 4
        %s713 = smul.addr %s712, 8
        %s714 = scalar_lea.vmem %s6, %s713
        %p715 = pneg %p215
        %p716 = pneg %p212
        %p717 = scmp.lt.s32.totalorder %s41, 1
        %s718 = scalar_select %p717, %s41, 1
        %s719 = scalar_lea.vmem %s7, %s718
        %p720 = pneg %p241
        %p721 = pneg %p238
        %p722 = scmp.lt.s32.totalorder %s41, 1
        %s723 = scalar_select %p722, %s41, 1
        %s724 = scalar_lea.vmem %s8, %s723
        %p725 = pneg %p267
        %p726 = pneg %p264
        %p727 = scmp.lt.s32.totalorder %s41, 1
        %s728 = scalar_select %p727, %s41, 1
        %s729 = scalar_lea.vmem %s9, %s728
        %p730 = pneg %p293
        %p731 = pneg %p290
        %p732 = scmp.lt.s32.totalorder %s41, 1
        %s733 = scalar_select %p732, %s41, 1
        %s734 = smul.addr %s733, 4
        %s735 = smul.addr %s734, 8
        %s736 = scalar_lea.vmem %s10, %s735
        %p737 = pneg %p319
        %p738 = pneg %p316
        %p739 = scmp.lt.s32.totalorder %s41, 1
        %s740 = scalar_select %p739, %s41, 1
        %s741 = scalar_lea.vmem %s11, %s740
        %p742 = pneg %p345
        %p743 = pneg %p342
        %p744 = scmp.lt.s32.totalorder %s41, 1
        %s745 = scalar_select %p744, %s41, 1
        %s746 = smul.addr %s745, 8
        %s747 = smul.addr %s746, 8
        %s748 = scalar_lea.vmem %s12, %s747
        %p749 = pneg %p371
        %p750 = pneg %p368
        %p751 = scmp.lt.s32.totalorder %s41, 1
        %s752 = scalar_select %p751, %s41, 1
        %s753 = scalar_lea.vmem %s13, %s752
        %p754 = pneg %p397
        %p755 = pneg %p394
        %p756 = scmp.lt.s32.totalorder %s41, 1
        %s757 = scalar_select %p756, %s41, 1
        %s758 = scalar_lea.vmem %s14, %s757
        %p759 = pneg %p423
        %p760 = pneg %p420
        %p761 = scmp.lt.s32.totalorder %s41, 1
        %s762 = scalar_select %p761, %s41, 1
        %s763 = scalar_lea.vmem %s15, %s762
        %p764 = pneg %p449
        %p765 = pneg %p446
        %p766 = pneg %p470
        %p767 = pneg %p467
        %p768 = pneg %p491
        %p769 = pneg %p488
        %p770 = pneg %p517
        %p771 = pneg %p514
        %s772 = sand.u32 %s504, 1
        %s773 = scalar_lea.sflag [#allocation5], %s772
        %s774 = sand.u32 %s504, 1
        %s775 = smul.addr %s774, 8
        %s776 = scalar_lea.vmem [#allocation8], %s775
        %p777 = scmp.lt.s32.totalorder %s40, 1
        %s778 = scalar_select %p777, %s40, 1
        %s779 = scalar_lea.vmem %s1, %s778
        %p780 = scmp.lt.s32.totalorder %s41, 1
        %s781 = scalar_select %p780, %s41, 1
        %s782 = smul.addr %s781, 4
        %s783 = smul.addr %s782, 8
        %s784 = scalar_lea.vmem %s4, %s783
        %p785 = scmp.lt.s32.totalorder %s41, 1
        %s786 = scalar_select %p785, %s41, 1
        %s787 = scalar_lea.vmem %s5, %s786
        %p788 = scmp.lt.s32.totalorder %s41, 1
        %s789 = scalar_select %p788, %s41, 1
        %s790 = smul.addr %s789, 4
        %s791 = smul.addr %s790, 8
        %s792 = scalar_lea.vmem %s6, %s791
        %p793 = scmp.lt.s32.totalorder %s41, 1
        %s794 = scalar_select %p793, %s41, 1
        %s795 = scalar_lea.vmem %s7, %s794
        %p796 = scmp.lt.s32.totalorder %s41, 1
        %s797 = scalar_select %p796, %s41, 1
        %s798 = scalar_lea.vmem %s8, %s797
        %p799 = scmp.lt.s32.totalorder %s41, 1
        %s800 = scalar_select %p799, %s41, 1
        %s801 = scalar_lea.vmem %s9, %s800
        %p802 = scmp.lt.s32.totalorder %s41, 1
        %s803 = scalar_select %p802, %s41, 1
        %s804 = smul.addr %s803, 4
        %s805 = smul.addr %s804, 8
        %s806 = scalar_lea.vmem %s10, %s805
        %p807 = scmp.lt.s32.totalorder %s41, 1
        %s808 = scalar_select %p807, %s41, 1
        %s809 = scalar_lea.vmem %s11, %s808
        %p810 = scmp.lt.s32.totalorder %s41, 1
        %s811 = scalar_select %p810, %s41, 1
        %s812 = smul.addr %s811, 8
        %s813 = smul.addr %s812, 8
        %s814 = scalar_lea.vmem %s12, %s813
        %p815 = scmp.lt.s32.totalorder %s41, 1
        %s816 = scalar_select %p815, %s41, 1
        %s817 = scalar_lea.vmem %s13, %s816
        %p818 = scmp.lt.s32.totalorder %s41, 1
        %s819 = scalar_select %p818, %s41, 1
        %s820 = scalar_lea.vmem %s14, %s819
        %p821 = scmp.lt.s32.totalorder %s41, 1
        %s822 = scalar_select %p821, %s41, 1
        %s823 = scalar_lea.vmem %s15, %s822
        %p824 = scmp.eq.s32.totalorder %s41, 0
        // Predicated region
        $region101: #{tpu_custom_call.1} parent=91 // pred_check
          %p825 = pneg %p824
        $region102: #{tpu_custom_call.1} parent=91 // pred_check_branch
          %827 = sbr.rel (%p825) target = $region104
        $region103: #{tpu_custom_call.1} parent=91 // pred_region
          %v828 = vld [vmem:[%s673] sm:$0xff]
          %v829 = vld [vmem:[#allocation6] sm:$0xff]
          %v830 = vld [vmem:[#allocation6 + $0x8] sm:$0xff]
          %v831 = vld [vmem:[%s3] sm:$0xff]
          %vm832 = vcmask 130048
          %v834 = vsel %vm832, %v828, 0
          %836 = vmatprep.subr.mxu0 0.0
          %837 = vmatpush1.msra.mxu0 %v829
          %838 = vmatprep.subr.mxu0 0.0
          %839 = vmatpush1.msra.mxu0 %v830
          %840 = vmatprep.subr.mxu0 0.0
          %841 = vmatpush1.msra.mxu0 0.0
          %842 = vmatprep.subr.mxu0 0.0
          %843 = vmatpush1.msra.mxu0 0.0
          %844 = vmatprep.subr.mxu0 0.0
          %845 = vmatpush1.msra.mxu0 0.0
          %846 = vmatprep.subr.mxu0 0.0
          %847 = vmatpush1.msra.mxu0 0.0
          %848 = vmatprep.subr.mxu0 0.0
          %849 = vmatpush1.msra.mxu0 0.0
          %850 = vmatprep.subr.mxu0 0.0
          %851 = vmatpush1.msra.mxu0 0.0
          %852 = vmatprep.subr.mxu0 0.0
          %853 = vmatpush1.msra.mxu0 0.0
          %854 = vmatprep.subr.mxu0 0.0
          %855 = vmatpush1.msra.mxu0 0.0
          %856 = vmatprep.subr.mxu0 0.0
          %857 = vmatpush1.msra.mxu0 0.0
          %858 = vmatprep.subr.mxu0 0.0
          %859 = vmatpush1.msra.mxu0 0.0
          %860 = vmatprep.subr.mxu0 0.0
          %861 = vmatpush1.msra.mxu0 0.0
          %862 = vmatprep.subr.mxu0 0.0
          %863 = vmatpush1.msra.mxu0 0.0
          %864 = vmatprep.subr.mxu0 0.0
          %865 = vmatpush1.msra.mxu0 0.0
          %866 = vmatprep.subr.mxu0 0.0
          %867 = vmatpush1.msra.mxu0 0.0
          %868 = vmatprep.subr.mxu0 0.0
          %869 = vmatpush1.msra.mxu0 0.0
          %870 = vmatprep.subr.mxu0 0.0
          %871 = vmatpush1.msra.mxu0 0.0
          %872 = vmatprep.subr.mxu0 0.0
          %873 = vmatpush1.msra.mxu0 0.0
          %874 = vmatprep.subr.mxu0 0.0
          %875 = vmatpush1.msra.mxu0 0.0
          %876 = vmatprep.subr.mxu0 0.0
          %877 = vmatpush1.msra.mxu0 0.0
          %878 = vmatprep.subr.mxu0 0.0
          %879 = vmatpush1.msra.mxu0 0.0
          %880 = vmatprep.subr.mxu0 0.0
          %881 = vmatpush1.msra.mxu0 0.0
          %882 = vmatprep.subr.mxu0 0.0
          %883 = vmatpush1.msra.mxu0 0.0
          %884 = vmatprep.subr.mxu0 0.0
          %885 = vmatpush1.msra.mxu0 0.0
          %886 = vmatprep.subr.mxu0 0.0
          %887 = vmatpush1.msra.mxu0 0.0
          %888 = vmatprep.subr.mxu0 0.0
          %889 = vmatpush1.msra.mxu0 0.0
          %890 = vmatprep.subr.mxu0 0.0
          %891 = vmatpush1.msra.mxu0 0.0
          %892 = vmatprep.subr.mxu0 0.0
          %893 = vmatpush1.msra.mxu0 0.0
          %894 = vmatprep.subr.mxu0 0.0
          %895 = vmatpush1.msra.mxu0 0.0
          %896 = vmatprep.subr.mxu0 0.0
          %897 = vmatpush1.msra.mxu0 0.0
          %898 = vmatprep.subr.mxu0 0.0
          %899 = vmatpush1.msra.mxu0 0.0
          %900 = vmatprep.mubr.f32.mxu0 0.0
          %901 = vmatmul.mubr.f32.gmra.mrb[0].mxu0 %v834
          %v902 = vpop.f32.mrb[0].mxu0
          %v903 = vadd.f32 %v831, %v902
          %v904 = vpop.f32.mrb[0].mxu0
          %905 = vdwg.mxu0
          %vm906 = vcmask 261120
          %907 = vst.msk [vmem:[#allocation2] sm:$0xff] %vm906, %v903
        $region104: #{tpu_custom_call.1} parent=91 // pred_fallthru
          _
        %v908 = vld [vmem:[#allocation2] sm:$0xff]
        %v909 = vld [vmem:[%s779] sm:$0x1]
        %v910 = vld [vmem:[%s784] sm:$0xff]
        %v911 = vld [vmem:[%s784 + $0x8] sm:$0xff]
        %v912 = vld [vmem:[%s784 + $0x10] sm:$0xff]
        %v913 = vld [vmem:[%s784 + $0x18] sm:$0xff]
        %v914 = vld [vmem:[%s787] sm:$0x1]
        %v916 = vlaneseq
        %v917 = vshrl.u32 %v916, 7
        %v918 = vsub.s32 0, %v917
        %v919 = vrot.slane %v914, %v918
        %vm921 = vcmask 261120
        %v923 = vsel %vm921, %v908, 0
        %925 = vmatprep.subr.mxu0 0.0
        %926 = vmatpush1.msra.mxu0 %v910
        %927 = vmatprep.subr.mxu0 0.0
        %928 = vmatpush1.msra.mxu0 %v911
        %929 = vmatprep.subr.mxu0 0.0
        %930 = vmatpush1.msra.mxu0 %v912
        %931 = vmatprep.subr.mxu0 0.0
        %932 = vmatpush1.msra.mxu0 %v913
        %933 = vmatprep.subr.mxu0 0.0
        %934 = vmatpush1.msra.mxu0 0.0
        %935 = vmatprep.subr.mxu0 0.0
        %936 = vmatpush1.msra.mxu0 0.0
        %937 = vmatprep.subr.mxu0 0.0
        %938 = vmatpush1.msra.mxu0 0.0
        %939 = vmatprep.subr.mxu0 0.0
        %940 = vmatpush1.msra.mxu0 0.0
        %941 = vmatprep.subr.mxu0 0.0
        %942 = vmatpush1.msra.mxu0 0.0
        %943 = vmatprep.subr.mxu0 0.0
        %944 = vmatpush1.msra.mxu0 0.0
        %945 = vmatprep.subr.mxu0 0.0
        %946 = vmatpush1.msra.mxu0 0.0
        %947 = vmatprep.subr.mxu0 0.0
        %948 = vmatpush1.msra.mxu0 0.0
        %949 = vmatprep.subr.mxu0 0.0
        %950 = vmatpush1.msra.mxu0 0.0
        %951 = vmatprep.subr.mxu0 0.0
        %952 = vmatpush1.msra.mxu0 0.0
        %953 = vmatprep.subr.mxu0 0.0
        %954 = vmatpush1.msra.mxu0 0.0
        %955 = vmatprep.subr.mxu0 0.0
        %956 = vmatpush1.msra.mxu0 0.0
        %957 = vmatprep.subr.mxu0 0.0
        %958 = vmatpush1.msra.mxu0 0.0
        %959 = vmatprep.subr.mxu0 0.0
        %960 = vmatpush1.msra.mxu0 0.0
        %961 = vmatprep.subr.mxu0 0.0
        %962 = vmatpush1.msra.mxu0 0.0
        %963 = vmatprep.subr.mxu0 0.0
        %964 = vmatpush1.msra.mxu0 0.0
        %965 = vmatprep.subr.mxu0 0.0
        %966 = vmatpush1.msra.mxu0 0.0
        %967 = vmatprep.subr.mxu0 0.0
        %968 = vmatpush1.msra.mxu0 0.0
        %969 = vmatprep.subr.mxu0 0.0
        %970 = vmatpush1.msra.mxu0 0.0
        %971 = vmatprep.subr.mxu0 0.0
        %972 = vmatpush1.msra.mxu0 0.0
        %973 = vmatprep.subr.mxu0 0.0
        %974 = vmatpush1.msra.mxu0 0.0
        %975 = vmatprep.subr.mxu0 0.0
        %976 = vmatpush1.msra.mxu0 0.0
        %977 = vmatprep.subr.mxu0 0.0
        %978 = vmatpush1.msra.mxu0 0.0
        %979 = vmatprep.subr.mxu0 0.0
        %980 = vmatpush1.msra.mxu0 0.0
        %981 = vmatprep.subr.mxu0 0.0
        %982 = vmatpush1.msra.mxu0 0.0
        %983 = vmatprep.subr.mxu0 0.0
        %984 = vmatpush1.msra.mxu0 0.0
        %985 = vmatprep.subr.mxu0 0.0
        %986 = vmatpush1.msra.mxu0 0.0
        %987 = vmatprep.subr.mxu0 0.0
        %988 = vmatpush1.msra.mxu0 0.0
        %989 = vmatprep.mubr.f32.mxu0 0.0
        %990 = vmatmul.mubr.f32.gmra.mrb[0].mxu0 %v923
        %v991 = vpop.f32.mrb[0].mxu0
        %v992 = vadd.f32 %v919, %v991
        %v993 = vpop.f32.mrb[0].mxu0
        %994 = vdwg.mxu0
        %v996 = vlaneseq
        %v997 = vshrl.u32 %v996, 7
        %v998 = vsub.s32 0, %v997
        %v999 = vrot.slane %v909, %v998
        %1002 = vrot.lane.b32.xlu0 %v992, 96
        %v1003 = vpop.permute.xlu0 %1002
        %vm1004 = vcmask 64512
        %v1005 = vsel %vm1004, %v992, 0
        %v1007 = vsel %vm1004, %v1003, 0
        %1009 = vmatprep.subr.mxu0 0.0
        %1010 = vmatpush1.xpose.msra.mxu0 %v1007
        %1011 = vmatprep.subr.mxu0 0.0
        %1012 = vmatpush1.xpose.msra.mxu0 0.0
        %1013 = vmatprep.subr.mxu0 0.0
        %1014 = vmatpush1.xpose.msra.mxu0 0.0
        %1015 = vmatprep.subr.mxu0 0.0
        %1016 = vmatpush1.xpose.msra.mxu0 0.0
        %1017 = vmatprep.subr.mxu0 0.0
        %1018 = vmatpush1.xpose.msra.mxu0 0.0
        %1019 = vmatprep.subr.mxu0 0.0
        %1020 = vmatpush1.xpose.msra.mxu0 0.0
        %1021 = vmatprep.subr.mxu0 0.0
        %1022 = vmatpush1.xpose.msra.mxu0 0.0
        %1023 = vmatprep.subr.mxu0 0.0
        %1024 = vmatpush1.xpose.msra.mxu0 0.0
        %1025 = vmatprep.subr.mxu0 0.0
        %1026 = vmatpush1.xpose.msra.mxu0 0.0
        %1027 = vmatprep.subr.mxu0 0.0
        %1028 = vmatpush1.xpose.msra.mxu0 0.0
        %1029 = vmatprep.subr.mxu0 0.0
        %1030 = vmatpush1.xpose.msra.mxu0 0.0
        %1031 = vmatprep.subr.mxu0 0.0
        %1032 = vmatpush1.xpose.msra.mxu0 0.0
        %1033 = vmatprep.subr.mxu0 0.0
        %1034 = vmatpush1.xpose.msra.mxu0 0.0
        %1035 = vmatprep.subr.mxu0 0.0
        %1036 = vmatpush1.xpose.msra.mxu0 0.0
        %1037 = vmatprep.subr.mxu0 0.0
        %1038 = vmatpush1.xpose.msra.mxu0 0.0
        %1039 = vmatprep.subr.mxu0 0.0
        %1040 = vmatpush1.xpose.msra.mxu0 0.0
        %1041 = vmatprep.subr.mxu0 0.0
        %1042 = vmatpush1.xpose.msra.mxu0 0.0
        %1043 = vmatprep.subr.mxu0 0.0
        %1044 = vmatpush1.xpose.msra.mxu0 0.0
        %1045 = vmatprep.subr.mxu0 0.0
        %1046 = vmatpush1.xpose.msra.mxu0 0.0
        %1047 = vmatprep.subr.mxu0 0.0
        %1048 = vmatpush1.xpose.msra.mxu0 0.0
        %1049 = vmatprep.subr.mxu0 0.0
        %1050 = vmatpush1.xpose.msra.mxu0 0.0
        %1051 = vmatprep.subr.mxu0 0.0
        %1052 = vmatpush1.xpose.msra.mxu0 0.0
        %1053 = vmatprep.subr.mxu0 0.0
        %1054 = vmatpush1.xpose.msra.mxu0 0.0
        %1055 = vmatprep.subr.mxu0 0.0
        %1056 = vmatpush1.xpose.msra.mxu0 0.0
        %1057 = vmatprep.subr.mxu0 0.0
        %1058 = vmatpush1.xpose.msra.mxu0 0.0
        %1059 = vmatprep.subr.mxu0 0.0
        %1060 = vmatpush1.xpose.msra.mxu0 0.0
        %1061 = vmatprep.subr.mxu0 0.0
        %1062 = vmatpush1.xpose.msra.mxu0 0.0
        %1063 = vmatprep.subr.mxu0 0.0
        %1064 = vmatpush1.xpose.msra.mxu0 0.0
        %1065 = vmatprep.subr.mxu0 0.0
        %1066 = vmatpush1.xpose.msra.mxu0 0.0
        %1067 = vmatprep.subr.mxu0 0.0
        %1068 = vmatpush1.xpose.msra.mxu0 0.0
        %1069 = vmatprep.subr.mxu0 0.0
        %1070 = vmatpush1.xpose.msra.mxu0 0.0
        %1071 = vmatprep.subr.mxu0 0.0
        %1072 = vmatpush1.xpose.msra.mxu0 0.0
        %1073 = vmatprep.mubr.f32.mxu0 0.0
        %1074 = vmatmul.mubr.f32.gmra.mrb[0].mxu0 %v1005
        %v1075 = vpop.f32.mrb[0].mxu0
        %v1076 = vadd.f32 %v999, %v1075
        %v1077 = vpop.f32.mrb[0].mxu0
        %1078 = vdwg.mxu0
        %v1079 = vsel %vm1004, %v1076, -inf
        %1080 = vmax.xlane.f32.xlu0 %v1079
        %v1081 = vpop.xlane.xlu0 %1080
        %v1082 = vsub.f32 %v1076, %v1081
        %v1083 = vmul.f32 %v1082, 1.442695
        %v1084 = vpow.pop %v1083
        %v1085 = vsel %vm1004, %v1084, 0.0
        %1086 = vadd.xlane.f32.xlu0 %v1085
        %v1087 = vpop.xlane.xlu0 %1086
        %v1088 = vrcp.pop %v1087
        %v1089 = vmul.f32 %v1084, %v1088
        %1090 = vrot.lane.b32.xlu0 %v992, 64
        %v1091 = vpop.permute.xlu0 %1090
        %v1094 = vsel %vm1004, %v1089, 0
        %1096 = vmatprep.subr.mxu0 0.0
        %1097 = vmatpush1.msra.mxu0 %v1091
        %1098 = vmatprep.subr.mxu0 0.0
        %1099 = vmatpush1.msra.mxu0 0.0
        %1100 = vmatprep.subr.mxu0 0.0
        %1101 = vmatpush1.msra.mxu0 0.0
        %1102 = vmatprep.subr.mxu0 0.0
        %1103 = vmatpush1.msra.mxu0 0.0
        %1104 = vmatprep.subr.mxu0 0.0
        %1105 = vmatpush1.msra.mxu0 0.0
        %1106 = vmatprep.subr.mxu0 0.0
        %1107 = vmatpush1.msra.mxu0 0.0
        %1108 = vmatprep.subr.mxu0 0.0
        %1109 = vmatpush1.msra.mxu0 0.0
        %1110 = vmatprep.subr.mxu0 0.0
        %1111 = vmatpush1.msra.mxu0 0.0
        %1112 = vmatprep.subr.mxu0 0.0
        %1113 = vmatpush1.msra.mxu0 0.0
        %1114 = vmatprep.subr.mxu0 0.0
        %1115 = vmatpush1.msra.mxu0 0.0
        %1116 = vmatprep.subr.mxu0 0.0
        %1117 = vmatpush1.msra.mxu0 0.0
        %1118 = vmatprep.subr.mxu0 0.0
        %1119 = vmatpush1.msra.mxu0 0.0
        %1120 = vmatprep.subr.mxu0 0.0
        %1121 = vmatpush1.msra.mxu0 0.0
        %1122 = vmatprep.subr.mxu0 0.0
        %1123 = vmatpush1.msra.mxu0 0.0
        %1124 = vmatprep.subr.mxu0 0.0
        %1125 = vmatpush1.msra.mxu0 0.0
        %1126 = vmatprep.subr.mxu0 0.0
        %1127 = vmatpush1.msra.mxu0 0.0
        %1128 = vmatprep.subr.mxu0 0.0
        %1129 = vmatpush1.msra.mxu0 0.0
        %1130 = vmatprep.subr.mxu0 0.0
        %1131 = vmatpush1.msra.mxu0 0.0
        %1132 = vmatprep.subr.mxu0 0.0
        %1133 = vmatpush1.msra.mxu0 0.0
        %1134 = vmatprep.subr.mxu0 0.0
        %1135 = vmatpush1.msra.mxu0 0.0
        %1136 = vmatprep.subr.mxu0 0.0
        %1137 = vmatpush1.msra.mxu0 0.0
        %1138 = vmatprep.subr.mxu0 0.0
        %1139 = vmatpush1.msra.mxu0 0.0
        %1140 = vmatprep.subr.mxu0 0.0
        %1141 = vmatpush1.msra.mxu0 0.0
        %1142 = vmatprep.subr.mxu0 0.0
        %1143 = vmatpush1.msra.mxu0 0.0
        %1144 = vmatprep.subr.mxu0 0.0
        %1145 = vmatpush1.msra.mxu0 0.0
        %1146 = vmatprep.subr.mxu0 0.0
        %1147 = vmatpush1.msra.mxu0 0.0
        %1148 = vmatprep.subr.mxu0 0.0
        %1149 = vmatpush1.msra.mxu0 0.0
        %1150 = vmatprep.subr.mxu0 0.0
        %1151 = vmatpush1.msra.mxu0 0.0
        %1152 = vmatprep.subr.mxu0 0.0
        %1153 = vmatpush1.msra.mxu0 0.0
        %1154 = vmatprep.subr.mxu0 0.0
        %1155 = vmatpush1.msra.mxu0 0.0
        %1156 = vmatprep.subr.mxu0 0.0
        %1157 = vmatpush1.msra.mxu0 0.0
        %1158 = vmatprep.subr.mxu0 0.0
        %1159 = vmatpush1.msra.mxu0 0.0
        %1160 = vmatprep.mubr.f32.mxu0 0.0
        %1161 = vmatmul.mubr.f32.gmra.mrb[0].mxu0 %v1094
        %v1162 = vpop.f32.mrb[0].mxu0
        %v1163 = vadd.f32 0.0, %v1162
        %v1164 = vpop.f32.mrb[0].mxu0
        %1165 = vdwg.mxu0
        %1166 = vrot.lane.b32.xlu0 %v992, 120
        %v1167 = vpop.permute.xlu0 %1166
        %1168 = vrot.lane.b32.xlu0 %v992, 88
        %v1169 = vpop.permute.xlu0 %1168
        %v1170 = vsel %vm1004, %v1167, 0
        %v1172 = vsel %vm1004, %v1169, 0
        %1174 = vmatprep.subr.mxu0 0.0
        %1175 = vmatpush1.xpose.msra.mxu0 %v1172
        %1176 = vmatprep.subr.mxu0 0.0
        %1177 = vmatpush1.xpose.msra.mxu0 0.0
        %1178 = vmatprep.subr.mxu0 0.0
        %1179 = vmatpush1.xpose.msra.mxu0 0.0
        %1180 = vmatprep.subr.mxu0 0.0
        %1181 = vmatpush1.xpose.msra.mxu0 0.0
        %1182 = vmatprep.subr.mxu0 0.0
        %1183 = vmatpush1.xpose.msra.mxu0 0.0
        %1184 = vmatprep.subr.mxu0 0.0
        %1185 = vmatpush1.xpose.msra.mxu0 0.0
        %1186 = vmatprep.subr.mxu0 0.0
        %1187 = vmatpush1.xpose.msra.mxu0 0.0
        %1188 = vmatprep.subr.mxu0 0.0
        %1189 = vmatpush1.xpose.msra.mxu0 0.0
        %1190 = vmatprep.subr.mxu0 0.0
        %1191 = vmatpush1.xpose.msra.mxu0 0.0
        %1192 = vmatprep.subr.mxu0 0.0
        %1193 = vmatpush1.xpose.msra.mxu0 0.0
        %1194 = vmatprep.subr.mxu0 0.0
        %1195 = vmatpush1.xpose.msra.mxu0 0.0
        %1196 = vmatprep.subr.mxu0 0.0
        %1197 = vmatpush1.xpose.msra.mxu0 0.0
        %1198 = vmatprep.subr.mxu0 0.0
        %1199 = vmatpush1.xpose.msra.mxu0 0.0
        %1200 = vmatprep.subr.mxu0 0.0
        %1201 = vmatpush1.xpose.msra.mxu0 0.0
        %1202 = vmatprep.subr.mxu0 0.0
        %1203 = vmatpush1.xpose.msra.mxu0 0.0
        %1204 = vmatprep.subr.mxu0 0.0
        %1205 = vmatpush1.xpose.msra.mxu0 0.0
        %1206 = vmatprep.subr.mxu0 0.0
        %1207 = vmatpush1.xpose.msra.mxu0 0.0
        %1208 = vmatprep.subr.mxu0 0.0
        %1209 = vmatpush1.xpose.msra.mxu0 0.0
        %1210 = vmatprep.subr.mxu0 0.0
        %1211 = vmatpush1.xpose.msra.mxu0 0.0
        %1212 = vmatprep.subr.mxu0 0.0
        %1213 = vmatpush1.xpose.msra.mxu0 0.0
        %1214 = vmatprep.subr.mxu0 0.0
        %1215 = vmatpush1.xpose.msra.mxu0 0.0
        %1216 = vmatprep.subr.mxu0 0.0
        %1217 = vmatpush1.xpose.msra.mxu0 0.0
        %1218 = vmatprep.subr.mxu0 0.0
        %1219 = vmatpush1.xpose.msra.mxu0 0.0
        %1220 = vmatprep.subr.mxu0 0.0
        %1221 = vmatpush1.xpose.msra.mxu0 0.0
        %1222 = vmatprep.subr.mxu0 0.0
        %1223 = vmatpush1.xpose.msra.mxu0 0.0
        %1224 = vmatprep.subr.mxu0 0.0
        %1225 = vmatpush1.xpose.msra.mxu0 0.0
        %1226 = vmatprep.subr.mxu0 0.0
        %1227 = vmatpush1.xpose.msra.mxu0 0.0
        %1228 = vmatprep.subr.mxu0 0.0
        %1229 = vmatpush1.xpose.msra.mxu0 0.0
        %1230 = vmatprep.subr.mxu0 0.0
        %1231 = vmatpush1.xpose.msra.mxu0 0.0
        %1232 = vmatprep.subr.mxu0 0.0
        %1233 = vmatpush1.xpose.msra.mxu0 0.0
        %1234 = vmatprep.subr.mxu0 0.0
        %1235 = vmatpush1.xpose.msra.mxu0 0.0
        %1236 = vmatprep.subr.mxu0 0.0
        %1237 = vmatpush1.xpose.msra.mxu0 0.0
        %1238 = vmatprep.mubr.f32.mxu0 0.0
        %1239 = vmatmul.mubr.f32.gmra.mrb[0].mxu0 %v1170
        %v1240 = vpop.f32.mrb[0].mxu0
        %v1241 = vadd.f32 %v999, %v1240
        %v1242 = vpop.f32.mrb[0].mxu0
        %1243 = vdwg.mxu0
        %v1244 = vsel %vm1004, %v1241, -inf
        %1245 = vmax.xlane.f32.xlu0 %v1244
        %v1246 = vpop.xlane.xlu0 %1245
        %v1247 = vsub.f32 %v1241, %v1246
        %v1248 = vmul.f32 %v1247, 1.442695
        %v1249 = vpow.pop %v1248
        %v1250 = vsel %vm1004, %v1249, 0.0
        %1251 = vadd.xlane.f32.xlu0 %v1250
        %v1252 = vpop.xlane.xlu0 %1251
        %v1253 = vrcp.pop %v1252
        %v1254 = vmul.f32 %v1249, %v1253
        %1255 = vrot.lane.b32.xlu0 %v992, 56
        %v1256 = vpop.permute.xlu0 %1255
        %v1259 = vsel %vm1004, %v1254, 0
        %1261 = vmatprep.subr.mxu0 0.0
        %1262 = vmatpush1.msra.mxu0 %v1256
        %1263 = vmatprep.subr.mxu0 0.0
        %1264 = vmatpush1.msra.mxu0 0.0
        %1265 = vmatprep.subr.mxu0 0.0
        %1266 = vmatpush1.msra.mxu0 0.0
        %1267 = vmatprep.subr.mxu0 0.0
        %1268 = vmatpush1.msra.mxu0 0.0
        %1269 = vmatprep.subr.mxu0 0.0
        %1270 = vmatpush1.msra.mxu0 0.0
        %1271 = vmatprep.subr.mxu0 0.0
        %1272 = vmatpush1.msra.mxu0 0.0
        %1273 = vmatprep.subr.mxu0 0.0
        %1274 = vmatpush1.msra.mxu0 0.0
        %1275 = vmatprep.subr.mxu0 0.0
        %1276 = vmatpush1.msra.mxu0 0.0
        %1277 = vmatprep.subr.mxu0 0.0
        %1278 = vmatpush1.msra.mxu0 0.0
        %1279 = vmatprep.subr.mxu0 0.0
        %1280 = vmatpush1.msra.mxu0 0.0
        %1281 = vmatprep.subr.mxu0 0.0
        %1282 = vmatpush1.msra.mxu0 0.0
        %1283 = vmatprep.subr.mxu0 0.0
        %1284 = vmatpush1.msra.mxu0 0.0
        %1285 = vmatprep.subr.mxu0 0.0
        %1286 = vmatpush1.msra.mxu0 0.0
        %1287 = vmatprep.subr.mxu0 0.0
        %1288 = vmatpush1.msra.mxu0 0.0
        %1289 = vmatprep.subr.mxu0 0.0
        %1290 = vmatpush1.msra.mxu0 0.0
        %1291 = vmatprep.subr.mxu0 0.0
        %1292 = vmatpush1.msra.mxu0 0.0
        %1293 = vmatprep.subr.mxu0 0.0
        %1294 = vmatpush1.msra.mxu0 0.0
        %1295 = vmatprep.subr.mxu0 0.0
        %1296 = vmatpush1.msra.mxu0 0.0
        %1297 = vmatprep.subr.mxu0 0.0
        %1298 = vmatpush1.msra.mxu0 0.0
        %1299 = vmatprep.subr.mxu0 0.0
        %1300 = vmatpush1.msra.mxu0 0.0
        %1301 = vmatprep.subr.mxu0 0.0
        %1302 = vmatpush1.msra.mxu0 0.0
        %1303 = vmatprep.subr.mxu0 0.0
        %1304 = vmatpush1.msra.mxu0 0.0
        %1305 = vmatprep.subr.mxu0 0.0
        %1306 = vmatpush1.msra.mxu0 0.0
        %1307 = vmatprep.subr.mxu0 0.0
        %1308 = vmatpush1.msra.mxu0 0.0
        %1309 = vmatprep.subr.mxu0 0.0
        %1310 = vmatpush1.msra.mxu0 0.0
        %1311 = vmatprep.subr.mxu0 0.0
        %1312 = vmatpush1.msra.mxu0 0.0
        %1313 = vmatprep.subr.mxu0 0.0
        %1314 = vmatpush1.msra.mxu0 0.0
        %1315 = vmatprep.subr.mxu0 0.0
        %1316 = vmatpush1.msra.mxu0 0.0
        %1317 = vmatprep.subr.mxu0 0.0
        %1318 = vmatpush1.msra.mxu0 0.0
        %1319 = vmatprep.subr.mxu0 0.0
        %1320 = vmatpush1.msra.mxu0 0.0
        %1321 = vmatprep.subr.mxu0 0.0
        %1322 = vmatpush1.msra.mxu0 0.0
        %1323 = vmatprep.subr.mxu0 0.0
        %1324 = vmatpush1.msra.mxu0 0.0
        %1325 = vmatprep.mubr.f32.mxu0 0.0
        %1326 = vmatmul.mubr.f32.gmra.mrb[0].mxu0 %v1259
        %v1327 = vpop.f32.mrb[0].mxu0
        %v1328 = vadd.f32 0.0, %v1327
        %v1329 = vpop.f32.mrb[0].mxu0
        %1330 = vdwg.mxu0
        %1331 = vrot.lane.b32.xlu0 %v992, 112
        %v1332 = vpop.permute.xlu0 %1331
        %1333 = vrot.lane.b32.xlu0 %v992, 80
        %v1334 = vpop.permute.xlu0 %1333
        %v1335 = vsel %vm1004, %v1332, 0
        %v1337 = vsel %vm1004, %v1334, 0
        %1339 = vmatprep.subr.mxu0 0.0
        %1340 = vmatpush1.xpose.msra.mxu0 %v1337
        %1341 = vmatprep.subr.mxu0 0.0
        %1342 = vmatpush1.xpose.msra.mxu0 0.0
        %1343 = vmatprep.subr.mxu0 0.0
        %1344 = vmatpush1.xpose.msra.mxu0 0.0
        %1345 = vmatprep.subr.mxu0 0.0
        %1346 = vmatpush1.xpose.msra.mxu0 0.0
        %1347 = vmatprep.subr.mxu0 0.0
        %1348 = vmatpush1.xpose.msra.mxu0 0.0
        %1349 = vmatprep.subr.mxu0 0.0
        %1350 = vmatpush1.xpose.msra.mxu0 0.0
        %1351 = vmatprep.subr.mxu0 0.0
        %1352 = vmatpush1.xpose.msra.mxu0 0.0
        %1353 = vmatprep.subr.mxu0 0.0
        %1354 = vmatpush1.xpose.msra.mxu0 0.0
        %1355 = vmatprep.subr.mxu0 0.0
        %1356 = vmatpush1.xpose.msra.mxu0 0.0
        %1357 = vmatprep.subr.mxu0 0.0
        %1358 = vmatpush1.xpose.msra.mxu0 0.0
        %1359 = vmatprep.subr.mxu0 0.0
        %1360 = vmatpush1.xpose.msra.mxu0 0.0
        %1361 = vmatprep.subr.mxu0 0.0
        %1362 = vmatpush1.xpose.msra.mxu0 0.0
        %1363 = vmatprep.subr.mxu0 0.0
        %1364 = vmatpush1.xpose.msra.mxu0 0.0
        %1365 = vmatprep.subr.mxu0 0.0
        %1366 = vmatpush1.xpose.msra.mxu0 0.0
        %1367 = vmatprep.subr.mxu0 0.0
        %1368 = vmatpush1.xpose.msra.mxu0 0.0
        %1369 = vmatprep.subr.mxu0 0.0
        %1370 = vmatpush1.xpose.msra.mxu0 0.0
        %1371 = vmatprep.subr.mxu0 0.0
        %1372 = vmatpush1.xpose.msra.mxu0 0.0
        %1373 = vmatprep.subr.mxu0 0.0
        %1374 = vmatpush1.xpose.msra.mxu0 0.0
        %1375 = vmatprep.subr.mxu0 0.0
        %1376 = vmatpush1.xpose.msra.mxu0 0.0
        %1377 = vmatprep.subr.mxu0 0.0
        %1378 = vmatpush1.xpose.msra.mxu0 0.0
        %1379 = vmatprep.subr.mxu0 0.0
        %1380 = vmatpush1.xpose.msra.mxu0 0.0
        %1381 = vmatprep.subr.mxu0 0.0
        %1382 = vmatpush1.xpose.msra.mxu0 0.0
        %1383 = vmatprep.subr.mxu0 0.0
        %1384 = vmatpush1.xpose.msra.mxu0 0.0
        %1385 = vmatprep.subr.mxu0 0.0
        %1386 = vmatpush1.xpose.msra.mxu0 0.0
        %1387 = vmatprep.subr.mxu0 0.0
        %1388 = vmatpush1.xpose.msra.mxu0 0.0
        %1389 = vmatprep.subr.mxu0 0.0
        %1390 = vmatpush1.xpose.msra.mxu0 0.0
        %1391 = vmatprep.subr.mxu0 0.0
        %1392 = vmatpush1.xpose.msra.mxu0 0.0
        %1393 = vmatprep.subr.mxu0 0.0
        %1394 = vmatpush1.xpose.msra.mxu0 0.0
        %1395 = vmatprep.subr.mxu0 0.0
        %1396 = vmatpush1.xpose.msra.mxu0 0.0
        %1397 = vmatprep.subr.mxu0 0.0
        %1398 = vmatpush1.xpose.msra.mxu0 0.0
        %1399 = vmatprep.subr.mxu0 0.0
        %1400 = vmatpush1.xpose.msra.mxu0 0.0
        %1401 = vmatprep.subr.mxu0 0.0
        %1402 = vmatpush1.xpose.msra.mxu0 0.0
        %1403 = vmatprep.mubr.f32.mxu0 0.0
        %1404 = vmatmul.mubr.f32.gmra.mrb[0].mxu0 %v1335
        %v1405 = vpop.f32.mrb[0].mxu0
        %v1406 = vadd.f32 %v999, %v1405
        %v1407 = vpop.f32.mrb[0].mxu0
        %1408 = vdwg.mxu0
        %v1409 = vsel %vm1004, %v1406, -inf
        %1410 = vmax.xlane.f32.xlu0 %v1409
        %v1411 = vpop.xlane.xlu0 %1410
        %v1412 = vsub.f32 %v1406, %v1411
        %v1413 = vmul.f32 %v1412, 1.442695
        %v1414 = vpow.pop %v1413
        %v1415 = vsel %vm1004, %v1414, 0.0
        %1416 = vadd.xlane.f32.xlu0 %v1415
        %v1417 = vpop.xlane.xlu0 %1416
        %v1418 = vrcp.pop %v1417
        %v1419 = vmul.f32 %v1414, %v1418
        %1420 = vrot.lane.b32.xlu0 %v992, 48
        %v1421 = vpop.permute.xlu0 %1420
        %v1424 = vsel %vm1004, %v1419, 0
        %1426 = vmatprep.subr.mxu0 0.0
        %1427 = vmatpush1.msra.mxu0 %v1421
        %1428 = vmatprep.subr.mxu0 0.0
        %1429 = vmatpush1.msra.mxu0 0.0
        %1430 = vmatprep.subr.mxu0 0.0
        %1431 = vmatpush1.msra.mxu0 0.0
        %1432 = vmatprep.subr.mxu0 0.0
        %1433 = vmatpush1.msra.mxu0 0.0
        %1434 = vmatprep.subr.mxu0 0.0
        %1435 = vmatpush1.msra.mxu0 0.0
        %1436 = vmatprep.subr.mxu0 0.0
        %1437 = vmatpush1.msra.mxu0 0.0
        %1438 = vmatprep.subr.mxu0 0.0
        %1439 = vmatpush1.msra.mxu0 0.0
        %1440 = vmatprep.subr.mxu0 0.0
        %1441 = vmatpush1.msra.mxu0 0.0
        %1442 = vmatprep.subr.mxu0 0.0
        %1443 = vmatpush1.msra.mxu0 0.0
        %1444 = vmatprep.subr.mxu0 0.0
        %1445 = vmatpush1.msra.mxu0 0.0
        %1446 = vmatprep.subr.mxu0 0.0
        %1447 = vmatpush1.msra.mxu0 0.0
        %1448 = vmatprep.subr.mxu0 0.0
        %1449 = vmatpush1.msra.mxu0 0.0
        %1450 = vmatprep.subr.mxu0 0.0
        %1451 = vmatpush1.msra.mxu0 0.0
        %1452 = vmatprep.subr.mxu0 0.0
        %1453 = vmatpush1.msra.mxu0 0.0
        %1454 = vmatprep.subr.mxu0 0.0
        %1455 = vmatpush1.msra.mxu0 0.0
        %1456 = vmatprep.subr.mxu0 0.0
        %1457 = vmatpush1.msra.mxu0 0.0
        %1458 = vmatprep.subr.mxu0 0.0
        %1459 = vmatpush1.msra.mxu0 0.0
        %1460 = vmatprep.subr.mxu0 0.0
        %1461 = vmatpush1.msra.mxu0 0.0
        %1462 = vmatprep.subr.mxu0 0.0
        %1463 = vmatpush1.msra.mxu0 0.0
        %1464 = vmatprep.subr.mxu0 0.0
        %1465 = vmatpush1.msra.mxu0 0.0
        %1466 = vmatprep.subr.mxu0 0.0
        %1467 = vmatpush1.msra.mxu0 0.0
        %1468 = vmatprep.subr.mxu0 0.0
        %1469 = vmatpush1.msra.mxu0 0.0
        %1470 = vmatprep.subr.mxu0 0.0
        %1471 = vmatpush1.msra.mxu0 0.0
        %1472 = vmatprep.subr.mxu0 0.0
        %1473 = vmatpush1.msra.mxu0 0.0
        %1474 = vmatprep.subr.mxu0 0.0
        %1475 = vmatpush1.msra.mxu0 0.0
        %1476 = vmatprep.subr.mxu0 0.0
        %1477 = vmatpush1.msra.mxu0 0.0
        %1478 = vmatprep.subr.mxu0 0.0
        %1479 = vmatpush1.msra.mxu0 0.0
        %1480 = vmatprep.subr.mxu0 0.0
        %1481 = vmatpush1.msra.mxu0 0.0
        %1482 = vmatprep.subr.mxu0 0.0
        %1483 = vmatpush1.msra.mxu0 0.0
        %1484 = vmatprep.subr.mxu0 0.0
        %1485 = vmatpush1.msra.mxu0 0.0
        %1486 = vmatprep.subr.mxu0 0.0
        %1487 = vmatpush1.msra.mxu0 0.0
        %1488 = vmatprep.subr.mxu0 0.0
        %1489 = vmatpush1.msra.mxu0 0.0
        %1490 = vmatprep.mubr.f32.mxu0 0.0
        %1491 = vmatmul.mubr.f32.gmra.mrb[0].mxu0 %v1424
        %v1492 = vpop.f32.mrb[0].mxu0
        %v1493 = vadd.f32 0.0, %v1492
        %v1494 = vpop.f32.mrb[0].mxu0
        %1495 = vdwg.mxu0
        %1496 = vrot.lane.b32.xlu0 %v992, 104
        %v1497 = vpop.permute.xlu0 %1496
        %1498 = vrot.lane.b32.xlu0 %v992, 72
        %v1499 = vpop.permute.xlu0 %1498
        %v1500 = vsel %vm1004, %v1497, 0
        %v1502 = vsel %vm1004, %v1499, 0
        %1504 = vmatprep.subr.mxu0 0.0
        %1505 = vmatpush1.xpose.msra.mxu0 %v1502
        %1506 = vmatprep.subr.mxu0 0.0
        %1507 = vmatpush1.xpose.msra.mxu0 0.0
        %1508 = vmatprep.subr.mxu0 0.0
        %1509 = vmatpush1.xpose.msra.mxu0 0.0
        %1510 = vmatprep.subr.mxu0 0.0
        %1511 = vmatpush1.xpose.msra.mxu0 0.0
        %1512 = vmatprep.subr.mxu0 0.0
        %1513 = vmatpush1.xpose.msra.mxu0 0.0
        %1514 = vmatprep.subr.mxu0 0.0
        %1515 = vmatpush1.xpose.msra.mxu0 0.0
        %1516 = vmatprep.subr.mxu0 0.0
        %1517 = vmatpush1.xpose.msra.mxu0 0.0
        %1518 = vmatprep.subr.mxu0 0.0
        %1519 = vmatpush1.xpose.msra.mxu0 0.0
        %1520 = vmatprep.subr.mxu0 0.0
        %1521 = vmatpush1.xpose.msra.mxu0 0.0
        %1522 = vmatprep.subr.mxu0 0.0
        %1523 = vmatpush1.xpose.msra.mxu0 0.0
        %1524 = vmatprep.subr.mxu0 0.0
        %1525 = vmatpush1.xpose.msra.mxu0 0.0
        %1526 = vmatprep.subr.mxu0 0.0
        %1527 = vmatpush1.xpose.msra.mxu0 0.0
        %1528 = vmatprep.subr.mxu0 0.0
        %1529 = vmatpush1.xpose.msra.mxu0 0.0
        %1530 = vmatprep.subr.mxu0 0.0
        %1531 = vmatpush1.xpose.msra.mxu0 0.0
        %1532 = vmatprep.subr.mxu0 0.0
        %1533 = vmatpush1.xpose.msra.mxu0 0.0
        %1534 = vmatprep.subr.mxu0 0.0
        %1535 = vmatpush1.xpose.msra.mxu0 0.0
        %1536 = vmatprep.subr.mxu0 0.0
        %1537 = vmatpush1.xpose.msra.mxu0 0.0
        %1538 = vmatprep.subr.mxu0 0.0
        %1539 = vmatpush1.xpose.msra.mxu0 0.0
        %1540 = vmatprep.subr.mxu0 0.0
        %1541 = vmatpush1.xpose.msra.mxu0 0.0
        %1542 = vmatprep.subr.mxu0 0.0
        %1543 = vmatpush1.xpose.msra.mxu0 0.0
        %1544 = vmatprep.subr.mxu0 0.0
        %1545 = vmatpush1.xpose.msra.mxu0 0.0
        %1546 = vmatprep.subr.mxu0 0.0
        %1547 = vmatpush1.xpose.msra.mxu0 0.0
        %1548 = vmatprep.subr.mxu0 0.0
        %1549 = vmatpush1.xpose.msra.mxu0 0.0
        %1550 = vmatprep.subr.mxu0 0.0
        %1551 = vmatpush1.xpose.msra.mxu0 0.0
        %1552 = vmatprep.subr.mxu0 0.0
        %1553 = vmatpush1.xpose.msra.mxu0 0.0
        %1554 = vmatprep.subr.mxu0 0.0
        %1555 = vmatpush1.xpose.msra.mxu0 0.0
        %1556 = vmatprep.subr.mxu0 0.0
        %1557 = vmatpush1.xpose.msra.mxu0 0.0
        %1558 = vmatprep.subr.mxu0 0.0
        %1559 = vmatpush1.xpose.msra.mxu0 0.0
        %1560 = vmatprep.subr.mxu0 0.0
        %1561 = vmatpush1.xpose.msra.mxu0 0.0
        %1562 = vmatprep.subr.mxu0 0.0
        %1563 = vmatpush1.xpose.msra.mxu0 0.0
        %1564 = vmatprep.subr.mxu0 0.0
        %1565 = vmatpush1.xpose.msra.mxu0 0.0
        %1566 = vmatprep.subr.mxu0 0.0
        %1567 = vmatpush1.xpose.msra.mxu0 0.0
        %1568 = vmatprep.mubr.f32.mxu0 0.0
        %1569 = vmatmul.mubr.f32.gmra.mrb[0].mxu0 %v1500
        %v1570 = vpop.f32.mrb[0].mxu0
        %v1571 = vadd.f32 %v999, %v1570
        %v1572 = vpop.f32.mrb[0].mxu0
        %1573 = vdwg.mxu0
        %v1574 = vsel %vm1004, %v1571, -inf
        %1575 = vmax.xlane.f32.xlu0 %v1574
        %v1576 = vpop.xlane.xlu0 %1575
        %v1577 = vsub.f32 %v1571, %v1576
        %v1578 = vmul.f32 %v1577, 1.442695
        %v1579 = vpow.pop %v1578
        %v1580 = vsel %vm1004, %v1579, 0.0
        %1581 = vadd.xlane.f32.xlu0 %v1580
        %v1582 = vpop.xlane.xlu0 %1581
        %v1583 = vrcp.pop %v1582
        %v1584 = vmul.f32 %v1579, %v1583
        %1585 = vrot.lane.b32.xlu0 %v992, 40
        %v1586 = vpop.permute.xlu0 %1585
        %v1589 = vsel %vm1004, %v1584, 0
        %1591 = vmatprep.subr.mxu0 0.0
        %1592 = vmatpush1.msra.mxu0 %v1586
        %1593 = vmatprep.subr.mxu0 0.0
        %1594 = vmatpush1.msra.mxu0 0.0
        %1595 = vmatprep.subr.mxu0 0.0
        %1596 = vmatpush1.msra.mxu0 0.0
        %1597 = vmatprep.subr.mxu0 0.0
        %1598 = vmatpush1.msra.mxu0 0.0
        %1599 = vmatprep.subr.mxu0 0.0
        %1600 = vmatpush1.msra.mxu0 0.0
        %1601 = vmatprep.subr.mxu0 0.0
        %1602 = vmatpush1.msra.mxu0 0.0
        %1603 = vmatprep.subr.mxu0 0.0
        %1604 = vmatpush1.msra.mxu0 0.0
        %1605 = vmatprep.subr.mxu0 0.0
        %1606 = vmatpush1.msra.mxu0 0.0
        %1607 = vmatprep.subr.mxu0 0.0
        %1608 = vmatpush1.msra.mxu0 0.0
        %1609 = vmatprep.subr.mxu0 0.0
        %1610 = vmatpush1.msra.mxu0 0.0
        %1611 = vmatprep.subr.mxu0 0.0
        %1612 = vmatpush1.msra.mxu0 0.0
        %1613 = vmatprep.subr.mxu0 0.0
        %1614 = vmatpush1.msra.mxu0 0.0
        %1615 = vmatprep.subr.mxu0 0.0
        %1616 = vmatpush1.msra.mxu0 0.0
        %1617 = vmatprep.subr.mxu0 0.0
        %1618 = vmatpush1.msra.mxu0 0.0
        %1619 = vmatprep.subr.mxu0 0.0
        %1620 = vmatpush1.msra.mxu0 0.0
        %1621 = vmatprep.subr.mxu0 0.0
        %1622 = vmatpush1.msra.mxu0 0.0
        %1623 = vmatprep.subr.mxu0 0.0
        %1624 = vmatpush1.msra.mxu0 0.0
        %1625 = vmatprep.subr.mxu0 0.0
        %1626 = vmatpush1.msra.mxu0 0.0
        %1627 = vmatprep.subr.mxu0 0.0
        %1628 = vmatpush1.msra.mxu0 0.0
        %1629 = vmatprep.subr.mxu0 0.0
        %1630 = vmatpush1.msra.mxu0 0.0
        %1631 = vmatprep.subr.mxu0 0.0
        %1632 = vmatpush1.msra.mxu0 0.0
        %1633 = vmatprep.subr.mxu0 0.0
        %1634 = vmatpush1.msra.mxu0 0.0
        %1635 = vmatprep.subr.mxu0 0.0
        %1636 = vmatpush1.msra.mxu0 0.0
        %1637 = vmatprep.subr.mxu0 0.0
        %1638 = vmatpush1.msra.mxu0 0.0
        %1639 = vmatprep.subr.mxu0 0.0
        %1640 = vmatpush1.msra.mxu0 0.0
        %1641 = vmatprep.subr.mxu0 0.0
        %1642 = vmatpush1.msra.mxu0 0.0
        %1643 = vmatprep.subr.mxu0 0.0
        %1644 = vmatpush1.msra.mxu0 0.0
        %1645 = vmatprep.subr.mxu0 0.0
        %1646 = vmatpush1.msra.mxu0 0.0
        %1647 = vmatprep.subr.mxu0 0.0
        %1648 = vmatpush1.msra.mxu0 0.0
        %1649 = vmatprep.subr.mxu0 0.0
        %1650 = vmatpush1.msra.mxu0 0.0
        %1651 = vmatprep.subr.mxu0 0.0
        %1652 = vmatpush1.msra.mxu0 0.0
        %1653 = vmatprep.subr.mxu0 0.0
        %1654 = vmatpush1.msra.mxu0 0.0
        %1655 = vmatprep.mubr.f32.mxu0 0.0
        %1656 = vmatmul.mubr.f32.gmra.mrb[0].mxu0 %v1589
        %v1657 = vpop.f32.mrb[0].mxu0
        %v1658 = vadd.f32 0.0, %v1657
        %v1659 = vpop.f32.mrb[0].mxu0
        %1660 = vdwg.mxu0
        %1662 = vrot.lane.b32.xlu0 %v1328, 8
        %v1663 = vpop.permute.xlu0 %1662
        %1666 = vrot.lane.b32.xlu0 %v1493, 16
        %v1667 = vpop.permute.xlu0 %1666
        %1670 = vrot.lane.b32.xlu0 %v1658, 24
        %v1671 = vpop.permute.xlu0 %1670
        %v1673 = vsel %vm1004, %v1163, %v1663
        %vm1674 = vcmask 130048
        %v1675 = vsel %vm1674, %v1673, %v1667
        %vm1676 = vcmask 195584
        %v1677 = vsel %vm1676, %v1675, %v1671
        %v1678 = vld [vmem:[%s792] sm:$0xff]
        %v1679 = vld [vmem:[%s792 + $0x8] sm:$0xff]
        %v1680 = vld [vmem:[%s792 + $0x10] sm:$0xff]
        %v1681 = vld [vmem:[%s792 + $0x18] sm:$0xff]
        %v1682 = vld [vmem:[%s795] sm:$0x1]
        %v1684 = vlaneseq
        %v1685 = vshrl.u32 %v1684, 7
        %v1686 = vsub.s32 0, %v1685
        %v1687 = vrot.slane %v1682, %v1686
        %v1690 = vsel %vm921, %v1677, 0
        %1692 = vmatprep.subr.mxu0 0.0
        %1693 = vmatpush1.msra.mxu0 %v1678
        %1694 = vmatprep.subr.mxu0 0.0
        %1695 = vmatpush1.msra.mxu0 %v1679
        %1696 = vmatprep.subr.mxu0 0.0
        %1697 = vmatpush1.msra.mxu0 %v1680
        %1698 = vmatprep.subr.mxu0 0.0
        %1699 = vmatpush1.msra.mxu0 %v1681
        %1700 = vmatprep.subr.mxu0 0.0
        %1701 = vmatpush1.msra.mxu0 0.0
        %1702 = vmatprep.subr.mxu0 0.0
        %1703 = vmatpush1.msra.mxu0 0.0
        %1704 = vmatprep.subr.mxu0 0.0
        %1705 = vmatpush1.msra.mxu0 0.0
        %1706 = vmatprep.subr.mxu0 0.0
        %1707 = vmatpush1.msra.mxu0 0.0
        %1708 = vmatprep.subr.mxu0 0.0
        %1709 = vmatpush1.msra.mxu0 0.0
        %1710 = vmatprep.subr.mxu0 0.0
        %1711 = vmatpush1.msra.mxu0 0.0
        %1712 = vmatprep.subr.mxu0 0.0
        %1713 = vmatpush1.msra.mxu0 0.0
        %1714 = vmatprep.subr.mxu0 0.0
        %1715 = vmatpush1.msra.mxu0 0.0
        %1716 = vmatprep.subr.mxu0 0.0
        %1717 = vmatpush1.msra.mxu0 0.0
        %1718 = vmatprep.subr.mxu0 0.0
        %1719 = vmatpush1.msra.mxu0 0.0
        %1720 = vmatprep.subr.mxu0 0.0
        %1721 = vmatpush1.msra.mxu0 0.0
        %1722 = vmatprep.subr.mxu0 0.0
        %1723 = vmatpush1.msra.mxu0 0.0
        %1724 = vmatprep.subr.mxu0 0.0
        %1725 = vmatpush1.msra.mxu0 0.0
        %1726 = vmatprep.subr.mxu0 0.0
        %1727 = vmatpush1.msra.mxu0 0.0
        %1728 = vmatprep.subr.mxu0 0.0
        %1729 = vmatpush1.msra.mxu0 0.0
        %1730 = vmatprep.subr.mxu0 0.0
        %1731 = vmatpush1.msra.mxu0 0.0
        %1732 = vmatprep.subr.mxu0 0.0
        %1733 = vmatpush1.msra.mxu0 0.0
        %1734 = vmatprep.subr.mxu0 0.0
        %1735 = vmatpush1.msra.mxu0 0.0
        %1736 = vmatprep.subr.mxu0 0.0
        %1737 = vmatpush1.msra.mxu0 0.0
        %1738 = vmatprep.subr.mxu0 0.0
        %1739 = vmatpush1.msra.mxu0 0.0
        %1740 = vmatprep.subr.mxu0 0.0
        %1741 = vmatpush1.msra.mxu0 0.0
        %1742 = vmatprep.subr.mxu0 0.0
        %1743 = vmatpush1.msra.mxu0 0.0
        %1744 = vmatprep.subr.mxu0 0.0
        %1745 = vmatpush1.msra.mxu0 0.0
        %1746 = vmatprep.subr.mxu0 0.0
        %1747 = vmatpush1.msra.mxu0 0.0
        %1748 = vmatprep.subr.mxu0 0.0
        %1749 = vmatpush1.msra.mxu0 0.0
        %1750 = vmatprep.subr.mxu0 0.0
        %1751 = vmatpush1.msra.mxu0 0.0
        %1752 = vmatprep.subr.mxu0 0.0
        %1753 = vmatpush1.msra.mxu0 0.0
        %1754 = vmatprep.subr.mxu0 0.0
        %1755 = vmatpush1.msra.mxu0 0.0
        %1756 = vmatprep.mubr.f32.mxu0 0.0
        %1757 = vmatmul.mubr.f32.gmra.mrb[0].mxu0 %v1690
        %v1758 = vpop.f32.mrb[0].mxu0
        %v1759 = vadd.f32 %v1687, %v1758
        %v1760 = vpop.f32.mrb[0].mxu0
        %1761 = vdwg.mxu0
        %v1762 = vadd.f32 %v908, %v1759
        %v1763 = vld [vmem:[%s798] sm:$0x1]
        %v1764 = vld [vmem:[%s801] sm:$0x1]
        %v1765 = vsel %vm921, %v1762, 0.0
        %1766 = vadd.xlane.f32.xlu0 %v1765
        %v1767 = vpop.xlane.xlu0 %1766
        %v1768 = vrcp.pop 32.0
        %v1769 = vmul.f32 %v1767, %v1768
        %v1770 = vsub.f32 %v1762, %v1769
        %v1771 = vmul.f32 %v1770, %v1770
        %v1772 = vsel %vm921, %v1771, 0.0
        %1773 = vadd.xlane.f32.xlu0 %v1772
        %v1774 = vpop.xlane.xlu0 %1773
        %v1775 = vmul.f32 %v1774, %v1768
        %v1776 = vadd.f32 %v1775, 1e-05
        %v1777 = vrsqrt.pop %v1776
        %v1778 = vmul.f32 %v1770, %v1777
        %v1780 = vlaneseq
        %v1781 = vshrl.u32 %v1780, 7
        %v1782 = vsub.s32 0, %v1781
        %v1783 = vrot.slane %v1763, %v1782
        %v1785 = vmul.f32 %v1778, %v1783
        %v1787 = vlaneseq
        %v1788 = vshrl.u32 %v1787, 7
        %v1789 = vsub.s32 0, %v1788
        %v1790 = vrot.slane %v1764, %v1789
        %v1792 = vadd.f32 %v1785, %v1790
        %v1793 = vld [vmem:[%s806] sm:$0xff]
        %v1794 = vld [vmem:[%s806 + $0x8] sm:$0xff]
        %v1795 = vld [vmem:[%s806 + $0x10] sm:$0xff]
        %v1796 = vld [vmem:[%s806 + $0x18] sm:$0xff]
        %v1797 = vld [vmem:[%s809] sm:$0x1]
        %v1799 = vlaneseq
        %v1800 = vshrl.u32 %v1799, 7
        %v1801 = vsub.s32 0, %v1800
        %v1802 = vrot.slane %v1797, %v1801
        %v1805 = vsel %vm921, %v1792, 0
        %1807 = vmatprep.subr.mxu0 0.0
        %1808 = vmatpush1.msra.mxu0 %v1793
        %1809 = vmatprep.subr.mxu0 0.0
        %1810 = vmatpush1.msra.mxu0 %v1794
        %1811 = vmatprep.subr.mxu0 0.0
        %1812 = vmatpush1.msra.mxu0 %v1795
        %1813 = vmatprep.subr.mxu0 0.0
        %1814 = vmatpush1.msra.mxu0 %v1796
        %1815 = vmatprep.subr.mxu0 0.0
        %1816 = vmatpush1.msra.mxu0 0.0
        %1817 = vmatprep.subr.mxu0 0.0
        %1818 = vmatpush1.msra.mxu0 0.0
        %1819 = vmatprep.subr.mxu0 0.0
        %1820 = vmatpush1.msra.mxu0 0.0
        %1821 = vmatprep.subr.mxu0 0.0
        %1822 = vmatpush1.msra.mxu0 0.0
        %1823 = vmatprep.subr.mxu0 0.0
        %1824 = vmatpush1.msra.mxu0 0.0
        %1825 = vmatprep.subr.mxu0 0.0
        %1826 = vmatpush1.msra.mxu0 0.0
        %1827 = vmatprep.subr.mxu0 0.0
        %1828 = vmatpush1.msra.mxu0 0.0
        %1829 = vmatprep.subr.mxu0 0.0
        %1830 = vmatpush1.msra.mxu0 0.0
        %1831 = vmatprep.subr.mxu0 0.0
        %1832 = vmatpush1.msra.mxu0 0.0
        %1833 = vmatprep.subr.mxu0 0.0
        %1834 = vmatpush1.msra.mxu0 0.0
        %1835 = vmatprep.subr.mxu0 0.0
        %1836 = vmatpush1.msra.mxu0 0.0
        %1837 = vmatprep.subr.mxu0 0.0
        %1838 = vmatpush1.msra.mxu0 0.0
        %1839 = vmatprep.subr.mxu0 0.0
        %1840 = vmatpush1.msra.mxu0 0.0
        %1841 = vmatprep.subr.mxu0 0.0
        %1842 = vmatpush1.msra.mxu0 0.0
        %1843 = vmatprep.subr.mxu0 0.0
        %1844 = vmatpush1.msra.mxu0 0.0
        %1845 = vmatprep.subr.mxu0 0.0
        %1846 = vmatpush1.msra.mxu0 0.0
        %1847 = vmatprep.subr.mxu0 0.0
        %1848 = vmatpush1.msra.mxu0 0.0
        %1849 = vmatprep.subr.mxu0 0.0
        %1850 = vmatpush1.msra.mxu0 0.0
        %1851 = vmatprep.subr.mxu0 0.0
        %1852 = vmatpush1.msra.mxu0 0.0
        %1853 = vmatprep.subr.mxu0 0.0
        %1854 = vmatpush1.msra.mxu0 0.0
        %1855 = vmatprep.subr.mxu0 0.0
        %1856 = vmatpush1.msra.mxu0 0.0
        %1857 = vmatprep.subr.mxu0 0.0
        %1858 = vmatpush1.msra.mxu0 0.0
        %1859 = vmatprep.subr.mxu0 0.0
        %1860 = vmatpush1.msra.mxu0 0.0
        %1861 = vmatprep.subr.mxu0 0.0
        %1862 = vmatpush1.msra.mxu0 0.0
        %1863 = vmatprep.subr.mxu0 0.0
        %1864 = vmatpush1.msra.mxu0 0.0
        %1865 = vmatprep.subr.mxu0 0.0
        %1866 = vmatpush1.msra.mxu0 0.0
        %1867 = vmatprep.subr.mxu0 0.0
        %1868 = vmatpush1.msra.mxu0 0.0
        %1869 = vmatprep.subr.mxu0 0.0
        %1870 = vmatpush1.msra.mxu0 0.0
        %1871 = vmatprep.mubr.f32.mxu0 0.0
        %1872 = vmatmul.mubr.f32.gmra.mrb[0].mxu0 %v1805
        %v1873 = vpop.f32.mrb[0].mxu0
        %v1874 = vadd.f32 %v1802, %v1873
        %v1875 = vpop.f32.mrb[0].mxu0
        %1876 = vdwg.mxu0
        %v1877 = vmax.f32 %v1874, 0.0
        %v1878 = vld [vmem:[%s814] sm:$0xff]
        %v1879 = vld [vmem:[%s814 + $0x8] sm:$0xff]
        %v1880 = vld [vmem:[%s814 + $0x10] sm:$0xff]
        %v1881 = vld [vmem:[%s814 + $0x18] sm:$0xff]
        %v1882 = vld [vmem:[%s814 + $0x20] sm:$0xff]
        %v1883 = vld [vmem:[%s814 + $0x28] sm:$0xff]
        %v1884 = vld [vmem:[%s814 + $0x30] sm:$0xff]
        %v1885 = vld [vmem:[%s814 + $0x38] sm:$0xff]
        %v1886 = vld [vmem:[%s817] sm:$0x1]
        %v1888 = vlaneseq
        %v1889 = vshrl.u32 %v1888, 7
        %v1890 = vsub.s32 0, %v1889
        %v1891 = vrot.slane %v1886, %v1890
        %vm1893 = vcmask 523264
        %v1895 = vsel %vm1893, %v1877, 0
        %1897 = vmatprep.subr.mxu0 0.0
        %1898 = vmatpush1.msra.mxu0 %v1878
        %1899 = vmatprep.subr.mxu0 0.0
        %1900 = vmatpush1.msra.mxu0 %v1879
        %1901 = vmatprep.subr.mxu0 0.0
        %1902 = vmatpush1.msra.mxu0 %v1880
        %1903 = vmatprep.subr.mxu0 0.0
        %1904 = vmatpush1.msra.mxu0 %v1881
        %1905 = vmatprep.subr.mxu0 0.0
        %1906 = vmatpush1.msra.mxu0 %v1882
        %1907 = vmatprep.subr.mxu0 0.0
        %1908 = vmatpush1.msra.mxu0 %v1883
        %1909 = vmatprep.subr.mxu0 0.0
        %1910 = vmatpush1.msra.mxu0 %v1884
        %1911 = vmatprep.subr.mxu0 0.0
        %1912 = vmatpush1.msra.mxu0 %v1885
        %1913 = vmatprep.subr.mxu0 0.0
        %1914 = vmatpush1.msra.mxu0 0.0
        %1915 = vmatprep.subr.mxu0 0.0
        %1916 = vmatpush1.msra.mxu0 0.0
        %1917 = vmatprep.subr.mxu0 0.0
        %1918 = vmatpush1.msra.mxu0 0.0
        %1919 = vmatprep.subr.mxu0 0.0
        %1920 = vmatpush1.msra.mxu0 0.0
        %1921 = vmatprep.subr.mxu0 0.0
        %1922 = vmatpush1.msra.mxu0 0.0
        %1923 = vmatprep.subr.mxu0 0.0
        %1924 = vmatpush1.msra.mxu0 0.0
        %1925 = vmatprep.subr.mxu0 0.0
        %1926 = vmatpush1.msra.mxu0 0.0
        %1927 = vmatprep.subr.mxu0 0.0
        %1928 = vmatpush1.msra.mxu0 0.0
        %1929 = vmatprep.subr.mxu0 0.0
        %1930 = vmatpush1.msra.mxu0 0.0
        %1931 = vmatprep.subr.mxu0 0.0
        %1932 = vmatpush1.msra.mxu0 0.0
        %1933 = vmatprep.subr.mxu0 0.0
        %1934 = vmatpush1.msra.mxu0 0.0
        %1935 = vmatprep.subr.mxu0 0.0
        %1936 = vmatpush1.msra.mxu0 0.0
        %1937 = vmatprep.subr.mxu0 0.0
        %1938 = vmatpush1.msra.mxu0 0.0
        %1939 = vmatprep.subr.mxu0 0.0
        %1940 = vmatpush1.msra.mxu0 0.0
        %1941 = vmatprep.subr.mxu0 0.0
        %1942 = vmatpush1.msra.mxu0 0.0
        %1943 = vmatprep.subr.mxu0 0.0
        %1944 = vmatpush1.msra.mxu0 0.0
        %1945 = vmatprep.subr.mxu0 0.0
        %1946 = vmatpush1.msra.mxu0 0.0
        %1947 = vmatprep.subr.mxu0 0.0
        %1948 = vmatpush1.msra.mxu0 0.0
        %1949 = vmatprep.subr.mxu0 0.0
        %1950 = vmatpush1.msra.mxu0 0.0
        %1951 = vmatprep.subr.mxu0 0.0
        %1952 = vmatpush1.msra.mxu0 0.0
        %1953 = vmatprep.subr.mxu0 0.0
        %1954 = vmatpush1.msra.mxu0 0.0
        %1955 = vmatprep.subr.mxu0 0.0
        %1956 = vmatpush1.msra.mxu0 0.0
        %1957 = vmatprep.subr.mxu0 0.0
        %1958 = vmatpush1.msra.mxu0 0.0
        %1959 = vmatprep.subr.mxu0 0.0
        %1960 = vmatpush1.msra.mxu0 0.0
        %1961 = vmatprep.mubr.f32.mxu0 0.0
        %1962 = vmatmul.mubr.f32.gmra.mrb[0].mxu0 %v1895
        %v1963 = vpop.f32.mrb[0].mxu0
        %v1964 = vadd.f32 %v1891, %v1963
        %v1965 = vpop.f32.mrb[0].mxu0
        %1966 = vdwg.mxu0
        %v1967 = vadd.f32 %v1792, %v1964
        %v1968 = vld [vmem:[%s820] sm:$0x1]
        %v1969 = vld [vmem:[%s823] sm:$0x1]
        %v1970 = vsel %vm921, %v1967, 0.0
        %1971 = vadd.xlane.f32.xlu0 %v1970
        %v1972 = vpop.xlane.xlu0 %1971
        %v1973 = vmul.f32 %v1972, %v1768
        %v1974 = vsub.f32 %v1967, %v1973
        %v1975 = vmul.f32 %v1974, %v1974
        %v1976 = vsel %vm921, %v1975, 0.0
        %1977 = vadd.xlane.f32.xlu0 %v1976
        %v1978 = vpop.xlane.xlu0 %1977
        %v1979 = vmul.f32 %v1978, %v1768
        %v1980 = vadd.f32 %v1979, 1e-05
        %v1981 = vrsqrt.pop %v1980
        %v1982 = vmul.f32 %v1974, %v1981
        %v1984 = vlaneseq
        %v1985 = vshrl.u32 %v1984, 7
        %v1986 = vsub.s32 0, %v1985
        %v1987 = vrot.slane %v1968, %v1986
        %v1989 = vmul.f32 %v1982, %v1987
        %v1991 = vlaneseq
        %v1992 = vshrl.u32 %v1991, 7
        %v1993 = vsub.s32 0, %v1992
        %v1994 = vrot.slane %v1969, %v1993
        %v1996 = vadd.f32 %v1989, %v1994
        %1997 = vst.msk [vmem:[#allocation2] sm:$0xff] %vm921, %v1996
        %p1998 = scmp.eq.s32.totalorder %s41, 1
        // Predicated region
        $region105: #{tpu_custom_call.1} parent=91 // pred_check
          %p1999 = pneg %p1998
        $region106: #{tpu_custom_call.1} parent=91 // pred_check_branch
          %2001 = sbr.rel (%p1999) target = $region108
        $region107: #{tpu_custom_call.1} parent=91 // pred_region
          %v2002 = vld [vmem:[%s16] sm:$0x1]
          %v2003 = vld [vmem:[%s17] sm:$0x1]
          %v2004 = vsel %vm921, %v1996, 0.0
          %2005 = vadd.xlane.f32.xlu0 %v2004
          %v2006 = vpop.xlane.xlu0 %2005
          %v2007 = vmul.f32 %v2006, %v1768
          %v2008 = vsub.f32 %v1996, %v2007
          %v2009 = vmul.f32 %v2008, %v2008
          %v2010 = vsel %vm921, %v2009, 0.0
          %2011 = vadd.xlane.f32.xlu0 %v2010
          %v2012 = vpop.xlane.xlu0 %2011
          %v2013 = vmul.f32 %v2012, %v1768
          %v2014 = vadd.f32 %v2013, 1e-05
          %v2015 = vrsqrt.pop %v2014
          %v2016 = vmul.f32 %v2008, %v2015
          %v2018 = vlaneseq
          %v2019 = vshrl.u32 %v2018, 7
          %v2020 = vsub.s32 0, %v2019
          %v2021 = vrot.slane %v2002, %v2020
          %v2023 = vmul.f32 %v2016, %v2021
          %v2025 = vlaneseq
          %v2026 = vshrl.u32 %v2025, 7
          %v2027 = vsub.s32 0, %v2026
          %v2028 = vrot.slane %v2003, %v2027
          %v2030 = vadd.f32 %v2023, %v2028
          %2031 = vst.msk [vmem:[%s776] sm:$0xff] %vm921, %v2030
        $region108: #{tpu_custom_call.1} parent=91 // pred_fallthru
          _
        %s2032 = sand.u32 %s504, 1
        %s2033 = scalar_lea.sflag [#allocation5], %s2032
        %s2034 = sand.u32 %s504, 1
        %s2035 = smul.addr %s2034, 8
        %s2036 = scalar_lea.vmem [#allocation8], %s2035
        // Predicated region
        $region109: #{tpu_custom_call.1} parent=91 // pred_check
          %p2037 = pneg %p514
        $region110: #{tpu_custom_call.1} parent=91 // pred_check_branch
          %2039 = sbr.rel (%p2037) target = $region112
        $region111: #{tpu_custom_call.1} parent=91 // pred_region
          %s2041 = ssub.s32 128, 128
          %2042 = vsyncadd %s2033, %s2041
          %s2043 = smul.addr %s40, 128
          %s2044 = scalar_lea.hbm %s18, %s2043
          %s2046 = sshll.u32 %s2036, 4
          %s2047 = int_to_ptr.vmem [resolvable:$true] %s2046
          %2049 = dma.vmem_to_hbm [thread:$0]  %s2047, 128, %s2044, %s2033
        $region112: #{tpu_custom_call.1} parent=91 // pred_fallthru
          _
      $region92: #{tpu_custom_call.1} parent=5 // pred_fallthru
        _
      %p2050 = scmp.le.s32.totalorder 2, %s31
      // Predicated region
      $region113: #{tpu_custom_call.1} parent=5 // pred_check
        %p2051 = pneg %p2050
      $region114: #{tpu_custom_call.1} parent=5 // pred_check_branch
        %2053 = sbr.rel (%p2051) target = $region116
      $region115: #{tpu_custom_call.1} parent=5 // pred_region
        %s2054 = ssub.s32 %s31, 2
        // Predicated region
        $region117: #{tpu_custom_call.1} parent=115 // pred_check
          %p2055 = pneg %p520
        $region118: #{tpu_custom_call.1} parent=115 // pred_check_branch
          %2057 = sbr.rel (%p2055) target = $region120
        $region119: #{tpu_custom_call.1} parent=115 // pred_region
          %s2058 = sand.u32 %s505, 1
          %s2059 = scalar_lea.sflag [#allocation5], %s2058
          %s2060 = sand.u32 %s505, 1
          %s2061 = smul.addr %s2060, 8
          %s2062 = scalar_lea.vmem [#allocation8], %s2061
          %2063 = dma.done %s2059, 128
        $region120: #{tpu_custom_call.1} parent=115 // pred_fallthru
          _
      $region116: #{tpu_custom_call.1} parent=5 // pred_fallthru
        _
    $region6: #{tpu_custom_call.1} parent=1 // loop_footer
      %s35 = sadd.s32 1, %s31
    $region7: #{tpu_custom_call.1} parent=1 // loop_footer_branch
      %30 = sbr.rel target = $region3
    $region8: #{tpu_custom_call.1} parent=1 // loop_exit
      _
    %2064 = vsyncpa [#allocation4], 1
    %s2065 = scalar_lea.sflag [#allocation4], 1
    %2066 = vsyncpa %s2065, 1
    %2067 = vsyncpa [#allocation7], 1
    %2068 = vsyncpa [#allocation5], 1
    %s2069 = scalar_lea.sflag [#allocation5], 1
    %2070 = vsyncpa %s2069, 1

</llo_original>
